<compile_context>
chip_gen: v5e
topology: v5e:2x2
jax: 0.10.0
libtpu: 0.0.40
codegen_flags: <defaults>
</compile_context>

<pallas_src>
import functools
import math

import jax
import jax.numpy as jnp
from jax.experimental import pallas as pl
from jax.experimental.pallas import tpu as pltpu

SUBLANE = 8


def _round_up(x, m):
    return (x + m - 1) // m * m


def _choose_tile(b, b_tile):
    """Pick a batch tile: multiple of 8 (sublane rule on the block's second-to-last
    dim), <= b_tile, and giving an even number of grid steps >= 2 when possible so
    v7x's two TensorCores get balanced work (no effect on v5e/v6e: 1 TC)."""
    cap = max(SUBLANE, _round_up(b_tile, SUBLANE))
    if b <= SUBLANE:
        return SUBLANE
    if b <= cap:
        steps = 2                      # split small batches across both TCs (v7x)
    else:
        steps = pl.cdiv(b, cap)
        steps += steps % 2             # even step count -> balanced 2-TC sharding
    return min(cap, _round_up(pl.cdiv(b, steps), SUBLANE))


def _fused_mlp_kernel(x_ref, w1_ref, b1_ref, w2_ref, b2_ref, o_ref, *, precision):
    # One batch tile per grid step: two MXU matmuls + VPU bias-adds + relu, all
    # VMEM-resident.  Biases are tiny (1, H)/(1, D_out) resident blocks.
    h = jnp.dot(
        x_ref[...],
        w1_ref[...],
        preferred_element_type=jnp.float32,
        precision=precision,
    )
    h = jnp.maximum(h + b1_ref[...], 0.0)
    y = jnp.dot(
        h.astype(w2_ref.dtype),
        w2_ref[...],
        preferred_element_type=jnp.float32,
        precision=precision,
    )
    o_ref[...] = (y + b2_ref[...]).astype(o_ref.dtype)


@functools.partial(jax.jit, static_argnames=("b_tile", "precision"))
def sac_dnn_value_forward(
    x, w1, b1, w2, b2, *, b_tile=1024, precision=jax.lax.Precision.HIGHEST
):
    """Computes relu(x @ W1 + b1) @ W2 + b2 for x: [B, D_in].

    Kernel weight layout (transposed vs. PyTorch's [out, in]):
      w1: [D_in, H], b1: [H], w2: [H, D_out], b2: [D_out]
    """
    b, d_in = x.shape
    _, h = w1.shape
    _, d_out = w2.shape
    dtype = x.dtype

    tile = _choose_tile(b, b_tile)
    num_tiles = pl.cdiv(b, tile)       # ragged last block handled by Pallas

    b1_2d = b1.reshape(1, h)
    b2_2d = b2.reshape(1, d_out)

    itemsize = jnp.dtype(dtype).itemsize
    cost = pl.CostEstimate(
        flops=2 * b * (d_in * h + h * d_out),
        transcendentals=0,
        bytes_accessed=itemsize
        * (x.size + w1.size + b1.size + w2.size + b2.size + b * d_out),
    )

    kernel = functools.partial(_fused_mlp_kernel, precision=precision)

    return pl.pallas_call(
        kernel,
        out_shape=jax.ShapeDtypeStruct((b, d_out), dtype),
        grid=(num_tiles,),
        in_specs=[
            pl.BlockSpec((tile, d_in), lambda i: (i, 0)),    # x: streamed per tile
            pl.BlockSpec((d_in, h), lambda i: (0, 0)),       # W1: VMEM-resident
            pl.BlockSpec((1, h), lambda i: (0, 0)),          # b1: VMEM-resident
            pl.BlockSpec((h, d_out), lambda i: (0, 0)),      # W2: VMEM-resident
            pl.BlockSpec((1, d_out), lambda i: (0, 0)),      # b2: VMEM-resident
        ],
        out_specs=pl.BlockSpec((tile, d_out), lambda i: (i, 0)),
        compiler_params=pltpu.CompilerParams(
            dimension_semantics=("parallel",),
        ),
        cost_estimate=cost,
    )(x, w1, b1_2d, w2, b2_2d)


# ----------------------------- init & reference ------------------------------


def xavier_uniform(key, shape_out_in, gain=1.0, dtype=jnp.float32):
    """Matches torch.nn.init.xavier_uniform_ for a Linear weight [out, in]."""
    fan_out, fan_in = shape_out_in
    bound = gain * math.sqrt(6.0 / (fan_in + fan_out))
    return jax.random.uniform(key, shape_out_in, dtype, minval=-bound, maxval=bound)


def init_params(key, d_in, hidden, d_out, dtype=jnp.float32):
    """SACDNNValueNetwork init: xavier_uniform on weights (init_weight touches only
    weights); biases keep PyTorch's default U(-1/sqrt(fan_in), 1/sqrt(fan_in))."""
    k1, k2, k3, k4 = jax.random.split(key, 4)
    w1_pt = xavier_uniform(k1, (hidden, d_in), dtype=dtype)   # torch layout [out, in]
    w2_pt = xavier_uniform(k2, (d_out, hidden), dtype=dtype)
    b1 = jax.random.uniform(
        k3, (hidden,), dtype, minval=-1.0 / math.sqrt(d_in), maxval=1.0 / math.sqrt(d_in)
    )
    b2 = jax.random.uniform(
        k4, (d_out,), dtype, minval=-1.0 / math.sqrt(hidden), maxval=1.0 / math.sqrt(hidden)
    )
    # Kernel layout: W1 [in, H], W2 [H, out].
    return w1_pt.T, b1, w2_pt.T, b2


def reference_forward(x, w1, b1, w2, b2):
    h = jnp.maximum(jnp.dot(x, w1, precision=jax.lax.Precision.HIGHEST) + b1, 0.0)
    return jnp.dot(h, w2, precision=jax.lax.Precision.HIGHEST) + b2


if __name__ == "__main__":
    # config = {'dnn_fc1': (32, 64), 'dnn_fc2': (64, 8), 'initial_weight_required': True}
    D_IN, HIDDEN, D_OUT = 32, 64, 8
    B = 200  # deliberately not a multiple of the batch tile to exercise ragged blocks

    key = jax.random.PRNGKey(0)
    kx, kp = jax.random.split(key)
    x = jax.random.normal(kx, (B, D_IN), jnp.float32)
    w1, b1, w2, b2 = init_params(kp, D_IN, HIDDEN, D_OUT)

    out = sac_dnn_value_forward(x, w1, b1, w2, b2)
    out = jax.block_until_ready(out)

    ref = reference_forward(x, w1, b1, w2, b2)
    assert out.shape == (B, D_OUT)
    max_err = jnp.max(jnp.abs(out - ref))
    assert jnp.allclose(out, ref, atol=1e-4, rtol=1e-4), f"mismatch vs reference: {max_err:.3e}"

    print("KERNEL_OK")
</pallas_src>

<mosaic_0001>
module attributes {stable_mosaic.version = 11 : i64} {
  func.func @_fused_mlp_kernel(%arg0: i32, %arg1: memref<104x32xf32, #tpu.memory_space<vmem>>, %arg2: memref<32x64xf32, #tpu.memory_space<vmem>>, %arg3: memref<1x64xf32, #tpu.memory_space<vmem>>, %arg4: memref<64x8xf32, #tpu.memory_space<vmem>>, %arg5: memref<1x8xf32, #tpu.memory_space<vmem>>, %arg6: memref<104x8xf32, #tpu.memory_space<vmem>>) attributes {dimension_semantics = [#tpu.dimension_semantics<parallel>], iteration_bounds = array<i64: 2>, scalar_prefetch = 0 : i64, scratch_operands = 0 : i64, tpu.core_type = #tpu.core_type<tc>, window_params = [{transform_indices = @transform_0, window_bounds = array<i64: 104, 32>}, {pipeline_mode = #tpu.pipeline_mode<synchronous>, transform_indices = @transform_1, window_bounds = array<i64: 32, 64>}, {pipeline_mode = #tpu.pipeline_mode<synchronous>, transform_indices = @transform_2, window_bounds = array<i64: 1, 64>}, {pipeline_mode = #tpu.pipeline_mode<synchronous>, transform_indices = @transform_3, window_bounds = array<i64: 64, 8>}, {pipeline_mode = #tpu.pipeline_mode<synchronous>, transform_indices = @transform_4, window_bounds = array<i64: 1, 8>}, {transform_indices = @transform_5, window_bounds = array<i64: 104, 8>}]} {
    %c0 = arith.constant 0 : index
    %c0_0 = arith.constant 0 : index
    %0 = vector.load %arg1[%c0, %c0_0] : memref<104x32xf32, #tpu.memory_space<vmem>>, vector<104x32xf32>
    %c0_1 = arith.constant 0 : index
    %c0_2 = arith.constant 0 : index
    %1 = vector.load %arg2[%c0_1, %c0_2] : memref<32x64xf32, #tpu.memory_space<vmem>>, vector<32x64xf32>
    %cst = arith.constant dense<0.000000e+00> : vector<104x64xf32>
    %2 = tpu.matmul %0, %1, %cst {dimension_numbers = #tpu.dot_dimension_numbers<[1], [0], [0], [1], [0, 0, 1, 1], [], []>, precision = #tpu.contract_precision<fp32>} : vector<104x32xf32>, vector<32x64xf32>, vector<104x64xf32> -> vector<104x64xf32>
    %c0_3 = arith.constant 0 : index
    %c0_4 = arith.constant 0 : index
    %3 = vector.load %arg3[%c0_3, %c0_4] : memref<1x64xf32, #tpu.memory_space<vmem>>, vector<1x64xf32>
    %4 = vector.broadcast %3 : vector<1x64xf32> to vector<104x64xf32>
    %5 = arith.addf %2, %4 : vector<104x64xf32>
    %cst_5 = arith.constant 0.000000e+00 : f32
    %6 = vector.broadcast %cst_5 : f32 to vector<104x64xf32>
    %7 = arith.maximumf %5, %6 : vector<104x64xf32>
    %c0_6 = arith.constant 0 : index
    %c0_7 = arith.constant 0 : index
    %8 = vector.load %arg4[%c0_6, %c0_7] : memref<64x8xf32, #tpu.memory_space<vmem>>, vector<64x8xf32>
    %cst_8 = arith.constant dense<0.000000e+00> : vector<104x8xf32>
    %9 = tpu.matmul %7, %8, %cst_8 {dimension_numbers = #tpu.dot_dimension_numbers<[1], [0], [0], [1], [0, 0, 1, 1], [], []>, precision = #tpu.contract_precision<fp32>} : vector<104x64xf32>, vector<64x8xf32>, vector<104x8xf32> -> vector<104x8xf32>
    %c0_9 = arith.constant 0 : index
    %c0_10 = arith.constant 0 : index
    %10 = vector.load %arg5[%c0_9, %c0_10] : memref<1x8xf32, #tpu.memory_space<vmem>>, vector<1x8xf32>
    %11 = vector.broadcast %10 : vector<1x8xf32> to vector<104x8xf32>
    %12 = arith.addf %9, %11 : vector<104x8xf32>
    %c0_11 = arith.constant 0 : index
    %c0_12 = arith.constant 0 : index
    %13 = vector.load %arg6[%c0_11, %c0_12] : memref<104x8xf32, #tpu.memory_space<vmem>>, vector<104x8xf32>
    tpu.vector_store %arg6[%c0_11, %c0_12], %12 {strides = array<i32>} : memref<104x8xf32, #tpu.memory_space<vmem>>, vector<104x8xf32>,
    return
  }
  func.func @transform_0(%arg0: i32) -> (i32, i32) {
    %c0_i32 = arith.constant 0 : i32
    %c0_i32_0 = arith.constant 0 : i32
    return %arg0, %c0_i32 : i32, i32
  }
  func.func @transform_1(%arg0: i32) -> (i32, i32) {
    %c0_i32 = arith.constant 0 : i32
    %c0_i32_0 = arith.constant 0 : i32
    %c0_i32_1 = arith.constant 0 : i32
    return %c0_i32, %c0_i32_0 : i32, i32
  }
  func.func @transform_2(%arg0: i32) -> (i32, i32) {
    %c0_i32 = arith.constant 0 : i32
    %c0_i32_0 = arith.constant 0 : i32
    %c0_i32_1 = arith.constant 0 : i32
    return %c0_i32, %c0_i32_0 : i32, i32
  }
  func.func @transform_3(%arg0: i32) -> (i32, i32) {
    %c0_i32 = arith.constant 0 : i32
    %c0_i32_0 = arith.constant 0 : i32
    %c0_i32_1 = arith.constant 0 : i32
    return %c0_i32, %c0_i32_0 : i32, i32
  }
  func.func @transform_4(%arg0: i32) -> (i32, i32) {
    %c0_i32 = arith.constant 0 : i32
    %c0_i32_0 = arith.constant 0 : i32
    %c0_i32_1 = arith.constant 0 : i32
    return %c0_i32, %c0_i32_0 : i32, i32
  }
  func.func @transform_5(%arg0: i32) -> (i32, i32) {
    %c0_i32 = arith.constant 0 : i32
    %c0_i32_0 = arith.constant 0 : i32
    return %arg0, %c0_i32 : i32, i32
  }
}

</mosaic_0001>

<llo_original>
// kernel: sac_dnn_value_forward.1
$region0: #{sac_dnn_value_forward.1}
  #allocation0 [shape = 'u32[]', space=smem, size = 0x4, offset = 0x4, fixed_abs, tag = 'smem constant byte address 0x4 - core index']
  #allocation1 [shape = 'u32[72,128]{1,0:T(1,128)}', space=vmem, size = 0x9000, scoped, tag = 'internal scratch']
  %s0 = inlined_call_operand.vmem [shape: f32[200,32], index: 0, kind: input, shape index: {}]
  %s1 = inlined_call_operand.vmem [shape: f32[32,64], index: 1, kind: input, shape index: {}]
  %s2 = inlined_call_operand.vmem [shape: f32[1,64], index: 2, kind: input, shape index: {}]
  %s3 = inlined_call_operand.vmem [shape: f32[64,8], index: 3, kind: input, shape index: {}]
  %s4 = inlined_call_operand.vmem [shape: f32[1,8], index: 4, kind: input, shape index: {}]
  %s5 = inlined_call_operand.vmem [shape: f32[200,8], index: 5, kind: output, shape index: {}]
  %s6 = sld [smem:[#allocation0]]
  $region101: #{sac_dnn_value_forward.1} parent=0
    _
  %s8 = ssub.s32 1, %s6
  %s9 = scalar_select 0, %s8, %s6
  $region1: #{sac_dnn_value_forward.1} parent=0
    #allocation2 [shape = 'u8[106496]{0}', space=vmem, size = 0x1a000, scoped, tag = 'output window, operand 0']
    loop: start=0, step=1, limit=4
    $region2: #{sac_dnn_value_forward.1} parent=1 // loop_pre_header
      _
    $region3: #{sac_dnn_value_forward.1} parent=1 // loop_header
      %s11 = sphi 0, %s15
      %p12 = scmp.ge.s32.totalorder %s11, 4
      %s21 = sphi 0, %s23
      %s24 = sphi 0, %s21
      %s25 = sphi 0, %s24
      %s41 = sphi 0, %s25
      %s45 = sphi 0, %s45
      %s47 = sphi 0, %s45
      %s48 = sphi 0, %s47
      %s62 = sphi 0, %s48
      %s66 = sphi 0, %s66
      %s68 = sphi 0, %s66
      %s69 = sphi 0, %s68
      %s83 = sphi 0, %s69
      %s87 = sphi 0, %s87
      %s89 = sphi 0, %s87
      %s90 = sphi 0, %s89
      %s104 = sphi 0, %s90
      %s108 = sphi 0, %s108
      %s110 = sphi 0, %s108
      %s111 = sphi 0, %s110
      %s125 = sphi 0, %s111
      %s131 = sphi 0, %s133
      %s134 = sphi 0, %s131
      %s135 = sphi 0, %s134
      %s151 = sphi 0, %s135
    $region4: #{sac_dnn_value_forward.1} parent=1 // loop_header_branch
      %14 = sbr.rel (%p12) target = $region8
    $region5: #{sac_dnn_value_forward.1} parent=1 // loop_body
      %s16 = ssub.s32 %s11, 1
      %s17 = ssub.s32 %s11, 2
      %s18 = sadd.s32 %s11, 1
      %s19 = ssub.s32 %s11, %s18
      %p20 = scmp.eq.s32.totalorder %s19, 0
      %s22 = sadd.s32 %s21, 1
      %s23 = scalar_select %p20, %s21, %s22
      %p26 = pneg %p20
      %p27 = scmp.eq.s32.totalorder %s11, 1
      %p28 = por %p26, %p27
      %p29 = scmp.ne.s32.totalorder %s21, %s24
      %p30 = scmp.eq.s32.totalorder %s11, 0
      %p31 = por %p29, %p30
      %p32 = scmp.ne.s32.totalorder %s21, %s24
      %p33 = scmp.eq.s32.totalorder %s16, 1
      %p34 = por %p32, %p33
      %p35 = scmp.ne.s32.totalorder %s24, %s25
      %p36 = scmp.eq.s32.totalorder %s16, 0
      %p37 = por %p35, %p36
      %p38 = scmp.ne.s32.totalorder %s24, %s25
      %p39 = scmp.eq.s32.totalorder %s17, 1
      %p40 = por %p38, %p39
      %p42 = scmp.ne.s32.totalorder %s25, %s41
      %p43 = scmp.eq.s32.totalorder %s17, 0
      %p44 = por %p42, %p43
      %s46 = sadd.s32 %s45, 1
      %p49 = scmp.eq.s32.totalorder %s11, 1
      %p50 = scmp.ne.s32.totalorder %s45, %s47
      %p51 = scmp.eq.s32.totalorder %s11, 0
      %p52 = por %p50, %p51
      %p53 = scmp.ne.s32.totalorder %s45, %s47
      %p54 = scmp.eq.s32.totalorder %s16, 1
      %p55 = por %p53, %p54
      %p56 = scmp.ne.s32.totalorder %s47, %s48
      %p57 = scmp.eq.s32.totalorder %s16, 0
      %p58 = por %p56, %p57
      %p59 = scmp.ne.s32.totalorder %s47, %s48
      %p60 = scmp.eq.s32.totalorder %s17, 1
      %p61 = por %p59, %p60
      %p63 = scmp.ne.s32.totalorder %s48, %s62
      %p64 = scmp.eq.s32.totalorder %s17, 0
      %p65 = por %p63, %p64
      %s67 = sadd.s32 %s66, 1
      %p70 = scmp.eq.s32.totalorder %s11, 1
      %p71 = scmp.ne.s32.totalorder %s66, %s68
      %p72 = scmp.eq.s32.totalorder %s11, 0
      %p73 = por %p71, %p72
      %p74 = scmp.ne.s32.totalorder %s66, %s68
      %p75 = scmp.eq.s32.totalorder %s16, 1
      %p76 = por %p74, %p75
      %p77 = scmp.ne.s32.totalorder %s68, %s69
      %p78 = scmp.eq.s32.totalorder %s16, 0
      %p79 = por %p77, %p78
      %p80 = scmp.ne.s32.totalorder %s68, %s69
      %p81 = scmp.eq.s32.totalorder %s17, 1
      %p82 = por %p80, %p81
      %p84 = scmp.ne.s32.totalorder %s69, %s83
      %p85 = scmp.eq.s32.totalorder %s17, 0
      %p86 = por %p84, %p85
      %s88 = sadd.s32 %s87, 1
      %p91 = scmp.eq.s32.totalorder %s11, 1
      %p92 = scmp.ne.s32.totalorder %s87, %s89
      %p93 = scmp.eq.s32.totalorder %s11, 0
      %p94 = por %p92, %p93
      %p95 = scmp.ne.s32.totalorder %s87, %s89
      %p96 = scmp.eq.s32.totalorder %s16, 1
      %p97 = por %p95, %p96
      %p98 = scmp.ne.s32.totalorder %s89, %s90
      %p99 = scmp.eq.s32.totalorder %s16, 0
      %p100 = por %p98, %p99
      %p101 = scmp.ne.s32.totalorder %s89, %s90
      %p102 = scmp.eq.s32.totalorder %s17, 1
      %p103 = por %p101, %p102
      %p105 = scmp.ne.s32.totalorder %s90, %s104
      %p106 = scmp.eq.s32.totalorder %s17, 0
      %p107 = por %p105, %p106
      %s109 = sadd.s32 %s108, 1
      %p112 = scmp.eq.s32.totalorder %s11, 1
      %p113 = scmp.ne.s32.totalorder %s108, %s110
      %p114 = scmp.eq.s32.totalorder %s11, 0
      %p115 = por %p113, %p114
      %p116 = scmp.ne.s32.totalorder %s108, %s110
      %p117 = scmp.eq.s32.totalorder %s16, 1
      %p118 = por %p116, %p117
      %p119 = scmp.ne.s32.totalorder %s110, %s111
      %p120 = scmp.eq.s32.totalorder %s16, 0
      %p121 = por %p119, %p120
      %p122 = scmp.ne.s32.totalorder %s110, %s111
      %p123 = scmp.eq.s32.totalorder %s17, 1
      %p124 = por %p122, %p123
      %p126 = scmp.ne.s32.totalorder %s111, %s125
      %p127 = scmp.eq.s32.totalorder %s17, 0
      %p128 = por %p126, %p127
      %s129 = ssub.s32 %s11, %s18
      %p130 = scmp.eq.s32.totalorder %s129, 0
      %s132 = sadd.s32 %s131, 1
      %s133 = scalar_select %p130, %s131, %s132
      %p136 = pneg %p130
      %p137 = scmp.eq.s32.totalorder %s11, 1
      %p138 = por %p136, %p137
      %p139 = scmp.ne.s32.totalorder %s131, %s134
      %p140 = scmp.eq.s32.totalorder %s11, 0
      %p141 = por %p139, %p140
      %p142 = scmp.ne.s32.totalorder %s131, %s134
      %p143 = scmp.eq.s32.totalorder %s16, 1
      %p144 = por %p142, %p143
      %p145 = scmp.ne.s32.totalorder %s134, %s135
      %p146 = scmp.eq.s32.totalorder %s16, 0
      %p147 = por %p145, %p146
      %p148 = scmp.ne.s32.totalorder %s134, %s135
      %p149 = scmp.eq.s32.totalorder %s17, 1
      %p150 = por %p148, %p149
      %p152 = scmp.ne.s32.totalorder %s135, %s151
      %p153 = scmp.eq.s32.totalorder %s17, 0
      %p154 = por %p152, %p153
      %p155 = scmp.le.s32.totalorder 1, %s11
      %p156 = scmp.lt.s32.totalorder %s11, 3
      %p157 = pnand %p155, %p156
      %p158 = pneg %p157
      // Predicated region
      $region9: #{sac_dnn_value_forward.1} parent=5 // pred_check
        _
      $region10: #{sac_dnn_value_forward.1} parent=5 // pred_check_branch
        %160 = sbr.rel (%p157) target = $region12
      $region11: #{sac_dnn_value_forward.1} parent=5 // pred_region
        %s161 = ssub.s32 %s11, 1
        // Predicated region
        $region13: #{sac_dnn_value_forward.1} parent=11 // pred_check
          %p162 = pneg %p58
        $region14: #{sac_dnn_value_forward.1} parent=11 // pred_check_branch
          %164 = sbr.rel (%p162) target = $region16
        $region15: #{sac_dnn_value_forward.1} parent=11 // pred_region
          _
        $region16: #{sac_dnn_value_forward.1} parent=11 // pred_fallthru
          _
        // Predicated region
        $region17: #{sac_dnn_value_forward.1} parent=11 // pred_check
          %p165 = pneg %p79
        $region18: #{sac_dnn_value_forward.1} parent=11 // pred_check_branch
          %167 = sbr.rel (%p165) target = $region20
        $region19: #{sac_dnn_value_forward.1} parent=11 // pred_region
          _
        $region20: #{sac_dnn_value_forward.1} parent=11 // pred_fallthru
          _
        // Predicated region
        $region21: #{sac_dnn_value_forward.1} parent=11 // pred_check
          %p168 = pneg %p100
        $region22: #{sac_dnn_value_forward.1} parent=11 // pred_check_branch
          %170 = sbr.rel (%p168) target = $region24
        $region23: #{sac_dnn_value_forward.1} parent=11 // pred_region
          _
        $region24: #{sac_dnn_value_forward.1} parent=11 // pred_fallthru
          _
        // Predicated region
        $region25: #{sac_dnn_value_forward.1} parent=11 // pred_check
          %p171 = pneg %p121
        $region26: #{sac_dnn_value_forward.1} parent=11 // pred_check_branch
          %173 = sbr.rel (%p171) target = $region28
        $region27: #{sac_dnn_value_forward.1} parent=11 // pred_region
          _
        $region28: #{sac_dnn_value_forward.1} parent=11 // pred_fallthru
          _
      $region12: #{sac_dnn_value_forward.1} parent=5 // pred_fallthru
        _
      %p174 = scmp.lt.s32.totalorder %s11, 2
      // Predicated region
      $region29: #{sac_dnn_value_forward.1} parent=5 // pred_check
        %p175 = pneg %p174
      $region30: #{sac_dnn_value_forward.1} parent=5 // pred_check_branch
        %177 = sbr.rel (%p175) target = $region32
      $region31: #{sac_dnn_value_forward.1} parent=5 // pred_region
        // Predicated region
        $region33: #{sac_dnn_value_forward.1} parent=31 // pred_check
          %p178 = pneg %p31
        $region34: #{sac_dnn_value_forward.1} parent=31 // pred_check_branch
          %180 = sbr.rel (%p178) target = $region36
        $region35: #{sac_dnn_value_forward.1} parent=31 // pred_region
          %s181 = smul.u32 13, %s11
          %s182 = ssub.s32 25, %s181
          %p183 = scmp.lt.s32.totalorder %s182, 13
          %s184 = scalar_select %p183, %s182, 13
          %s185 = smul.u32 8, %s184
          %p186 = scmp.lt.s32.totalorder %s181, 24
          %s187 = scalar_select %p186, %s181, 24
          %s188 = smul.addr %s187, 8
          %s189 = scalar_lea.vmem %s0, %s188
          %s190 = smul.u32 13, %s11
          %s191 = ssub.s32 25, %s190
          %p192 = scmp.lt.s32.totalorder %s191, 13
          %s193 = scalar_select %p192, %s191, 13
          %s194 = smul.u32 8, %s193
        $region36: #{sac_dnn_value_forward.1} parent=31 // pred_fallthru
          _
      $region32: #{sac_dnn_value_forward.1} parent=5 // pred_fallthru
        _
      %p195 = scmp.le.s32.totalorder 1, %s11
      %p196 = scmp.lt.s32.totalorder %s11, 3
      %p197 = pnand %p195, %p196
      %p198 = pneg %p197
      // Predicated region
      $region37: #{sac_dnn_value_forward.1} parent=5 // pred_check
        _
      $region38: #{sac_dnn_value_forward.1} parent=5 // pred_check_branch
        %200 = sbr.rel (%p197) target = $region40
      $region39: #{sac_dnn_value_forward.1} parent=5 // pred_region
        %s201 = ssub.s32 %s11, 1
        %s202 = smul.u32 13, %s16
        %s203 = ssub.s32 25, %s202
        %p204 = scmp.lt.s32.totalorder %s203, 13
        %s205 = scalar_select %p204, %s203, 13
        %s206 = smul.u32 8, %s205
        %p207 = scmp.lt.s32.totalorder %s202, 24
        %s208 = scalar_select %p207, %s202, 24
        %s209 = smul.addr %s208, 8
        %s210 = scalar_lea.vmem %s0, %s209
        %p211 = pneg %p37
        %p212 = pneg %p34
        %p213 = pneg %p58
        %p214 = pneg %p55
        %p215 = pneg %p79
        %p216 = pneg %p76
        %p217 = pneg %p100
        %p218 = pneg %p97
        %p219 = pneg %p121
        %p220 = pneg %p118
        %p221 = pneg %p147
        %p222 = pneg %p144
        %s223 = sand.u32 %s134, 1
        %s224 = sand.u32 %s134, 1
        %s225 = smul.addr %s224, 104
        %s226 = scalar_lea.vmem [#allocation2], %s225
        %s227 = smul.u32 13, %s16
        %s228 = ssub.s32 25, %s227
        %p229 = scmp.lt.s32.totalorder %s228, 13
        %s230 = scalar_select %p229, %s228, 13
        %s231 = smul.u32 8, %s230
        %p232 = scmp.lt.s32.totalorder %s227, 24
        %s233 = scalar_select %p232, %s227, 24
        %s234 = smul.addr %s233, 8
        %s235 = scalar_lea.vmem %s0, %s234
        %s236 = smul.u32 13, %s16
        %s237 = ssub.s32 25, %s236
        %p238 = scmp.lt.s32.totalorder %s237, 13
        %s239 = scalar_select %p238, %s237, 13
        %s240 = smul.u32 8, %s239
        %s241 = smul.u32 13, %s16
        %s242 = ssub.s32 25, %s241
        %p243 = scmp.lt.s32.totalorder %s242, 13
        %s244 = scalar_select %p243, %s242, 13
        %s245 = smul.u32 8, %s244
        %v246 = vld [vmem:[%s235] sm:$0xff]
        %v247 = vld [vmem:[%s235 + $0x8] sm:$0xff]
        %v248 = vld [vmem:[%s235 + $0x10] sm:$0xff]
        %v249 = vld [vmem:[%s235 + $0x18] sm:$0xff]
        %v250 = vld [vmem:[%s235 + $0x20] sm:$0xff]
        %v251 = vld [vmem:[%s235 + $0x28] sm:$0xff]
        %v252 = vld [vmem:[%s235 + $0x30] sm:$0xff]
        %v253 = vld [vmem:[%s235 + $0x38] sm:$0xff]
        %v254 = vld [vmem:[%s235 + $0x40] sm:$0xff]
        %v255 = vld [vmem:[%s235 + $0x48] sm:$0xff]
        %v256 = vld [vmem:[%s235 + $0x50] sm:$0xff]
        %v257 = vld [vmem:[%s235 + $0x58] sm:$0xff]
        %v258 = vld [vmem:[%s235 + $0x60] sm:$0xff]
        %v259 = vld [vmem:[%s1] sm:$0xff]
        %v260 = vld [vmem:[%s1 + $0x8] sm:$0xff]
        %v261 = vld [vmem:[%s1 + $0x10] sm:$0xff]
        %v262 = vld [vmem:[%s1 + $0x18] sm:$0xff]
        %v263 = vld [vmem:[%s2] sm:$0x1]
        %v265 = vperm.slane %v263, 0
        %vm267 = vcmask 261120
        %v269 = vsel %vm267, %v246, 0
        %v272 = vsel %vm267, %v247, 0
        %v275 = vsel %vm267, %v248, 0
        %v278 = vsel %vm267, %v249, 0
        %v281 = vsel %vm267, %v250, 0
        %v284 = vsel %vm267, %v251, 0
        %v287 = vsel %vm267, %v252, 0
        %v290 = vsel %vm267, %v253, 0
        %v293 = vsel %vm267, %v254, 0
        %v296 = vsel %vm267, %v255, 0
        %v299 = vsel %vm267, %v256, 0
        %v302 = vsel %vm267, %v257, 0
        %v305 = vsel %vm267, %v258, 0
        %307 = vmatpush.msra.mxu0 0.0
        %308 = vmatpush.msra.mxu0 0.0
        %309 = vmatpush.msra.mxu0 0.0
        %310 = vmatpush.msra.mxu0 0.0
        %311 = vmatpush.msra.mxu0 0.0
        %312 = vmatpush.msra.mxu0 0.0
        %313 = vmatpush.msra.mxu0 0.0
        %314 = vmatpush.msra.mxu0 0.0
        %315 = vmatpush.msra.mxu0 0.0
        %316 = vmatpush.msra.mxu0 0.0
        %317 = vmatpush.msra.mxu0 0.0
        %318 = vmatpush.msra.mxu0 0.0
        %v319 = vand.u32 %v262, 4294901760
        %320 = vmatpush.msra.mxu0 %v319
        %v321 = vand.u32 %v261, 4294901760
        %322 = vmatpush.msra.mxu0 %v321
        %v323 = vand.u32 %v260, 4294901760
        %324 = vmatpush.msra.mxu0 %v323
        %v325 = vand.u32 %v259, 4294901760
        %326 = vmatpush.msra.mxu0 %v325
        %v327 = vand.u32 %v269, 4294901760
        %v328 = vsub.f32 %v269, %v327
        %v329 = vand.u32 %v328, 4294901760
        %v330 = vsub.f32 %v328, %v329
        %v331 = vand.u32 %v330, 4294901760
        %332 = vmatmul.f32.gmra.mxu0 %v331
        %v333 = vpop.f32.mrf.mxu0
        %v334 = vadd.f32 %v265, %v333
        %v335 = vand.u32 %v272, 4294901760
        %v336 = vsub.f32 %v272, %v335
        %v337 = vand.u32 %v336, 4294901760
        %v338 = vsub.f32 %v336, %v337
        %v339 = vand.u32 %v338, 4294901760
        %340 = vmatmul.f32.gmra.mxu0 %v339
        %v341 = vpop.f32.mrf.mxu0
        %v342 = vadd.f32 %v265, %v341
        %v343 = vand.u32 %v275, 4294901760
        %v344 = vsub.f32 %v275, %v343
        %v345 = vand.u32 %v344, 4294901760
        %v346 = vsub.f32 %v344, %v345
        %v347 = vand.u32 %v346, 4294901760
        %348 = vmatmul.f32.gmra.mxu0 %v347
        %v349 = vpop.f32.mrf.mxu0
        %v350 = vadd.f32 %v265, %v349
        %v351 = vand.u32 %v278, 4294901760
        %v352 = vsub.f32 %v278, %v351
        %v353 = vand.u32 %v352, 4294901760
        %v354 = vsub.f32 %v352, %v353
        %v355 = vand.u32 %v354, 4294901760
        %356 = vmatmul.f32.gmra.mxu0 %v355
        %v357 = vpop.f32.mrf.mxu0
        %v358 = vadd.f32 %v265, %v357
        %v359 = vand.u32 %v281, 4294901760
        %v360 = vsub.f32 %v281, %v359
        %v361 = vand.u32 %v360, 4294901760
        %v362 = vsub.f32 %v360, %v361
        %v363 = vand.u32 %v362, 4294901760
        %364 = vmatmul.f32.gmra.mxu0 %v363
        %v365 = vpop.f32.mrf.mxu0
        %v366 = vadd.f32 %v265, %v365
        %v367 = vand.u32 %v284, 4294901760
        %v368 = vsub.f32 %v284, %v367
        %v369 = vand.u32 %v368, 4294901760
        %v370 = vsub.f32 %v368, %v369
        %v371 = vand.u32 %v370, 4294901760
        %372 = vmatmul.f32.gmra.mxu0 %v371
        %v373 = vpop.f32.mrf.mxu0
        %v374 = vadd.f32 %v265, %v373
        %v375 = vand.u32 %v287, 4294901760
        %v376 = vsub.f32 %v287, %v375
        %v377 = vand.u32 %v376, 4294901760
        %v378 = vsub.f32 %v376, %v377
        %v379 = vand.u32 %v378, 4294901760
        %380 = vmatmul.f32.gmra.mxu0 %v379
        %v381 = vpop.f32.mrf.mxu0
        %v382 = vadd.f32 %v265, %v381
        %v383 = vand.u32 %v290, 4294901760
        %v384 = vsub.f32 %v290, %v383
        %v385 = vand.u32 %v384, 4294901760
        %v386 = vsub.f32 %v384, %v385
        %v387 = vand.u32 %v386, 4294901760
        %388 = vmatmul.f32.gmra.mxu0 %v387
        %v389 = vpop.f32.mrf.mxu0
        %v390 = vadd.f32 %v265, %v389
        %v391 = vand.u32 %v293, 4294901760
        %v392 = vsub.f32 %v293, %v391
        %v393 = vand.u32 %v392, 4294901760
        %v394 = vsub.f32 %v392, %v393
        %v395 = vand.u32 %v394, 4294901760
        %396 = vmatmul.f32.gmra.mxu0 %v395
        %v397 = vpop.f32.mrf.mxu0
        %v398 = vadd.f32 %v265, %v397
        %v399 = vand.u32 %v296, 4294901760
        %v400 = vsub.f32 %v296, %v399
        %v401 = vand.u32 %v400, 4294901760
        %v402 = vsub.f32 %v400, %v401
        %v403 = vand.u32 %v402, 4294901760
        %404 = vmatmul.f32.gmra.mxu0 %v403
        %v405 = vpop.f32.mrf.mxu0
        %v406 = vadd.f32 %v265, %v405
        %v407 = vand.u32 %v299, 4294901760
        %v408 = vsub.f32 %v299, %v407
        %v409 = vand.u32 %v408, 4294901760
        %v410 = vsub.f32 %v408, %v409
        %v411 = vand.u32 %v410, 4294901760
        %412 = vmatmul.f32.gmra.mxu0 %v411
        %v413 = vpop.f32.mrf.mxu0
        %v414 = vadd.f32 %v265, %v413
        %v415 = vand.u32 %v302, 4294901760
        %v416 = vsub.f32 %v302, %v415
        %v417 = vand.u32 %v416, 4294901760
        %v418 = vsub.f32 %v416, %v417
        %v419 = vand.u32 %v418, 4294901760
        %420 = vmatmul.f32.gmra.mxu0 %v419
        %v421 = vpop.f32.mrf.mxu0
        %v422 = vadd.f32 %v265, %v421
        %v423 = vand.u32 %v305, 4294901760
        %v424 = vsub.f32 %v305, %v423
        %v425 = vand.u32 %v424, 4294901760
        %v426 = vsub.f32 %v424, %v425
        %v427 = vand.u32 %v426, 4294901760
        %428 = vmatmul.f32.gmra.mxu0 %v427
        %v429 = vpop.f32.mrf.mxu0
        %v430 = vadd.f32 %v265, %v429
        %431 = vdwg.mxu0
        %432 = vmatpush.msra.mxu0 0.0
        %433 = vmatpush.msra.mxu0 0.0
        %434 = vmatpush.msra.mxu0 0.0
        %435 = vmatpush.msra.mxu0 0.0
        %436 = vmatpush.msra.mxu0 0.0
        %437 = vmatpush.msra.mxu0 0.0
        %438 = vmatpush.msra.mxu0 0.0
        %439 = vmatpush.msra.mxu0 0.0
        %440 = vmatpush.msra.mxu0 0.0
        %441 = vmatpush.msra.mxu0 0.0
        %442 = vmatpush.msra.mxu0 0.0
        %443 = vmatpush.msra.mxu0 0.0
        %v444 = vand.u32 %v262, 4294901760
        %v445 = vsub.f32 %v262, %v444
        %v446 = vand.u32 %v445, 4294901760
        %v447 = vsub.f32 %v445, %v446
        %v448 = vand.u32 %v447, 4294901760
        %449 = vmatpush.msra.mxu0 %v448
        %v450 = vand.u32 %v261, 4294901760
        %v451 = vsub.f32 %v261, %v450
        %v452 = vand.u32 %v451, 4294901760
        %v453 = vsub.f32 %v451, %v452
        %v454 = vand.u32 %v453, 4294901760
        %455 = vmatpush.msra.mxu0 %v454
        %v456 = vand.u32 %v260, 4294901760
        %v457 = vsub.f32 %v260, %v456
        %v458 = vand.u32 %v457, 4294901760
        %v459 = vsub.f32 %v457, %v458
        %v460 = vand.u32 %v459, 4294901760
        %461 = vmatpush.msra.mxu0 %v460
        %v462 = vand.u32 %v259, 4294901760
        %v463 = vsub.f32 %v259, %v462
        %v464 = vand.u32 %v463, 4294901760
        %v465 = vsub.f32 %v463, %v464
        %v466 = vand.u32 %v465, 4294901760
        %467 = vmatpush.msra.mxu0 %v466
        %v468 = vand.u32 %v269, 4294901760
        %469 = vmatmul.f32.gmra.mxu0 %v468
        %v470 = vpop.f32.mrf.mxu0
        %v471 = vadd.f32 %v334, %v470
        %v472 = vand.u32 %v272, 4294901760
        %473 = vmatmul.f32.gmra.mxu0 %v472
        %v474 = vpop.f32.mrf.mxu0
        %v475 = vadd.f32 %v342, %v474
        %v476 = vand.u32 %v275, 4294901760
        %477 = vmatmul.f32.gmra.mxu0 %v476
        %v478 = vpop.f32.mrf.mxu0
        %v479 = vadd.f32 %v350, %v478
        %v480 = vand.u32 %v278, 4294901760
        %481 = vmatmul.f32.gmra.mxu0 %v480
        %v482 = vpop.f32.mrf.mxu0
        %v483 = vadd.f32 %v358, %v482
        %v484 = vand.u32 %v281, 4294901760
        %485 = vmatmul.f32.gmra.mxu0 %v484
        %v486 = vpop.f32.mrf.mxu0
        %v487 = vadd.f32 %v366, %v486
        %v488 = vand.u32 %v284, 4294901760
        %489 = vmatmul.f32.gmra.mxu0 %v488
        %v490 = vpop.f32.mrf.mxu0
        %v491 = vadd.f32 %v374, %v490
        %v492 = vand.u32 %v287, 4294901760
        %493 = vmatmul.f32.gmra.mxu0 %v492
        %v494 = vpop.f32.mrf.mxu0
        %v495 = vadd.f32 %v382, %v494
        %v496 = vand.u32 %v290, 4294901760
        %497 = vmatmul.f32.gmra.mxu0 %v496
        %v498 = vpop.f32.mrf.mxu0
        %v499 = vadd.f32 %v390, %v498
        %v500 = vand.u32 %v293, 4294901760
        %501 = vmatmul.f32.gmra.mxu0 %v500
        %v502 = vpop.f32.mrf.mxu0
        %v503 = vadd.f32 %v398, %v502
        %v504 = vand.u32 %v296, 4294901760
        %505 = vmatmul.f32.gmra.mxu0 %v504
        %v506 = vpop.f32.mrf.mxu0
        %v507 = vadd.f32 %v406, %v506
        %v508 = vand.u32 %v299, 4294901760
        %509 = vmatmul.f32.gmra.mxu0 %v508
        %v510 = vpop.f32.mrf.mxu0
        %v511 = vadd.f32 %v414, %v510
        %v512 = vand.u32 %v302, 4294901760
        %513 = vmatmul.f32.gmra.mxu0 %v512
        %v514 = vpop.f32.mrf.mxu0
        %v515 = vadd.f32 %v422, %v514
        %v516 = vand.u32 %v305, 4294901760
        %517 = vmatmul.f32.gmra.mxu0 %v516
        %v518 = vpop.f32.mrf.mxu0
        %v519 = vadd.f32 %v430, %v518
        %520 = vdwg.mxu0
        %521 = vmatpush.msra.mxu0 0.0
        %522 = vmatpush.msra.mxu0 0.0
        %523 = vmatpush.msra.mxu0 0.0
        %524 = vmatpush.msra.mxu0 0.0
        %525 = vmatpush.msra.mxu0 0.0
        %526 = vmatpush.msra.mxu0 0.0
        %527 = vmatpush.msra.mxu0 0.0
        %528 = vmatpush.msra.mxu0 0.0
        %529 = vmatpush.msra.mxu0 0.0
        %530 = vmatpush.msra.mxu0 0.0
        %531 = vmatpush.msra.mxu0 0.0
        %532 = vmatpush.msra.mxu0 0.0
        %v533 = vand.u32 %v262, 4294901760
        %v534 = vsub.f32 %v262, %v533
        %535 = vmatpush.msra.mxu0 %v534
        %v536 = vand.u32 %v261, 4294901760
        %v537 = vsub.f32 %v261, %v536
        %538 = vmatpush.msra.mxu0 %v537
        %v539 = vand.u32 %v260, 4294901760
        %v540 = vsub.f32 %v260, %v539
        %541 = vmatpush.msra.mxu0 %v540
        %v542 = vand.u32 %v259, 4294901760
        %v543 = vsub.f32 %v259, %v542
        %544 = vmatpush.msra.mxu0 %v543
        %v545 = vand.u32 %v269, 4294901760
        %v546 = vsub.f32 %v269, %v545
        %547 = vmatmul.f32.gmra.mxu0 %v546
        %v548 = vpop.f32.mrf.mxu0
        %v549 = vadd.f32 %v471, %v548
        %v550 = vand.u32 %v272, 4294901760
        %v551 = vsub.f32 %v272, %v550
        %552 = vmatmul.f32.gmra.mxu0 %v551
        %v553 = vpop.f32.mrf.mxu0
        %v554 = vadd.f32 %v475, %v553
        %v555 = vand.u32 %v275, 4294901760
        %v556 = vsub.f32 %v275, %v555
        %557 = vmatmul.f32.gmra.mxu0 %v556
        %v558 = vpop.f32.mrf.mxu0
        %v559 = vadd.f32 %v479, %v558
        %v560 = vand.u32 %v278, 4294901760
        %v561 = vsub.f32 %v278, %v560
        %562 = vmatmul.f32.gmra.mxu0 %v561
        %v563 = vpop.f32.mrf.mxu0
        %v564 = vadd.f32 %v483, %v563
        %v565 = vand.u32 %v281, 4294901760
        %v566 = vsub.f32 %v281, %v565
        %567 = vmatmul.f32.gmra.mxu0 %v566
        %v568 = vpop.f32.mrf.mxu0
        %v569 = vadd.f32 %v487, %v568
        %v570 = vand.u32 %v284, 4294901760
        %v571 = vsub.f32 %v284, %v570
        %572 = vmatmul.f32.gmra.mxu0 %v571
        %v573 = vpop.f32.mrf.mxu0
        %v574 = vadd.f32 %v491, %v573
        %v575 = vand.u32 %v287, 4294901760
        %v576 = vsub.f32 %v287, %v575
        %577 = vmatmul.f32.gmra.mxu0 %v576
        %v578 = vpop.f32.mrf.mxu0
        %v579 = vadd.f32 %v495, %v578
        %v580 = vand.u32 %v290, 4294901760
        %v581 = vsub.f32 %v290, %v580
        %582 = vmatmul.f32.gmra.mxu0 %v581
        %v583 = vpop.f32.mrf.mxu0
        %v584 = vadd.f32 %v499, %v583
        %v585 = vand.u32 %v293, 4294901760
        %v586 = vsub.f32 %v293, %v585
        %587 = vmatmul.f32.gmra.mxu0 %v586
        %v588 = vpop.f32.mrf.mxu0
        %v589 = vadd.f32 %v503, %v588
        %v590 = vand.u32 %v296, 4294901760
        %v591 = vsub.f32 %v296, %v590
        %592 = vmatmul.f32.gmra.mxu0 %v591
        %v593 = vpop.f32.mrf.mxu0
        %v594 = vadd.f32 %v507, %v593
        %v595 = vand.u32 %v299, 4294901760
        %v596 = vsub.f32 %v299, %v595
        %597 = vmatmul.f32.gmra.mxu0 %v596
        %v598 = vpop.f32.mrf.mxu0
        %v599 = vadd.f32 %v511, %v598
        %v600 = vand.u32 %v302, 4294901760
        %v601 = vsub.f32 %v302, %v600
        %602 = vmatmul.f32.gmra.mxu0 %v601
        %v603 = vpop.f32.mrf.mxu0
        %v604 = vadd.f32 %v515, %v603
        %v605 = vand.u32 %v305, 4294901760
        %v606 = vsub.f32 %v305, %v605
        %607 = vmatmul.f32.gmra.mxu0 %v606
        %v608 = vpop.f32.mrf.mxu0
        %v609 = vadd.f32 %v519, %v608
        %610 = vdwg.mxu0
        %611 = vmatpush.msra.mxu0 0.0
        %612 = vmatpush.msra.mxu0 0.0
        %613 = vmatpush.msra.mxu0 0.0
        %614 = vmatpush.msra.mxu0 0.0
        %615 = vmatpush.msra.mxu0 0.0
        %616 = vmatpush.msra.mxu0 0.0
        %617 = vmatpush.msra.mxu0 0.0
        %618 = vmatpush.msra.mxu0 0.0
        %619 = vmatpush.msra.mxu0 0.0
        %620 = vmatpush.msra.mxu0 0.0
        %621 = vmatpush.msra.mxu0 0.0
        %622 = vmatpush.msra.mxu0 0.0
        %v623 = vand.u32 %v262, 4294901760
        %624 = vmatpush.msra.mxu0 %v623
        %v625 = vand.u32 %v261, 4294901760
        %626 = vmatpush.msra.mxu0 %v625
        %v627 = vand.u32 %v260, 4294901760
        %628 = vmatpush.msra.mxu0 %v627
        %v629 = vand.u32 %v259, 4294901760
        %630 = vmatpush.msra.mxu0 %v629
        %v631 = vand.u32 %v269, 4294901760
        %v632 = vsub.f32 %v269, %v631
        %v633 = vand.u32 %v632, 4294901760
        %634 = vmatmul.f32.gmra.mxu0 %v633
        %v635 = vpop.f32.mrf.mxu0
        %v636 = vadd.f32 %v549, %v635
        %v637 = vand.u32 %v272, 4294901760
        %v638 = vsub.f32 %v272, %v637
        %v639 = vand.u32 %v638, 4294901760
        %640 = vmatmul.f32.gmra.mxu0 %v639
        %v641 = vpop.f32.mrf.mxu0
        %v642 = vadd.f32 %v554, %v641
        %v643 = vand.u32 %v275, 4294901760
        %v644 = vsub.f32 %v275, %v643
        %v645 = vand.u32 %v644, 4294901760
        %646 = vmatmul.f32.gmra.mxu0 %v645
        %v647 = vpop.f32.mrf.mxu0
        %v648 = vadd.f32 %v559, %v647
        %v649 = vand.u32 %v278, 4294901760
        %v650 = vsub.f32 %v278, %v649
        %v651 = vand.u32 %v650, 4294901760
        %652 = vmatmul.f32.gmra.mxu0 %v651
        %v653 = vpop.f32.mrf.mxu0
        %v654 = vadd.f32 %v564, %v653
        %v655 = vand.u32 %v281, 4294901760
        %v656 = vsub.f32 %v281, %v655
        %v657 = vand.u32 %v656, 4294901760
        %658 = vmatmul.f32.gmra.mxu0 %v657
        %v659 = vpop.f32.mrf.mxu0
        %v660 = vadd.f32 %v569, %v659
        %v661 = vand.u32 %v284, 4294901760
        %v662 = vsub.f32 %v284, %v661
        %v663 = vand.u32 %v662, 4294901760
        %664 = vmatmul.f32.gmra.mxu0 %v663
        %v665 = vpop.f32.mrf.mxu0
        %v666 = vadd.f32 %v574, %v665
        %v667 = vand.u32 %v287, 4294901760
        %v668 = vsub.f32 %v287, %v667
        %v669 = vand.u32 %v668, 4294901760
        %670 = vmatmul.f32.gmra.mxu0 %v669
        %v671 = vpop.f32.mrf.mxu0
        %v672 = vadd.f32 %v579, %v671
        %v673 = vand.u32 %v290, 4294901760
        %v674 = vsub.f32 %v290, %v673
        %v675 = vand.u32 %v674, 4294901760
        %676 = vmatmul.f32.gmra.mxu0 %v675
        %v677 = vpop.f32.mrf.mxu0
        %v678 = vadd.f32 %v584, %v677
        %v679 = vand.u32 %v293, 4294901760
        %v680 = vsub.f32 %v293, %v679
        %v681 = vand.u32 %v680, 4294901760
        %682 = vmatmul.f32.gmra.mxu0 %v681
        %v683 = vpop.f32.mrf.mxu0
        %v684 = vadd.f32 %v589, %v683
        %v685 = vand.u32 %v296, 4294901760
        %v686 = vsub.f32 %v296, %v685
        %v687 = vand.u32 %v686, 4294901760
        %688 = vmatmul.f32.gmra.mxu0 %v687
        %v689 = vpop.f32.mrf.mxu0
        %v690 = vadd.f32 %v594, %v689
        %v691 = vand.u32 %v299, 4294901760
        %v692 = vsub.f32 %v299, %v691
        %v693 = vand.u32 %v692, 4294901760
        %694 = vmatmul.f32.gmra.mxu0 %v693
        %v695 = vpop.f32.mrf.mxu0
        %v696 = vadd.f32 %v599, %v695
        %v697 = vand.u32 %v302, 4294901760
        %v698 = vsub.f32 %v302, %v697
        %v699 = vand.u32 %v698, 4294901760
        %700 = vmatmul.f32.gmra.mxu0 %v699
        %v701 = vpop.f32.mrf.mxu0
        %v702 = vadd.f32 %v604, %v701
        %v703 = vand.u32 %v305, 4294901760
        %v704 = vsub.f32 %v305, %v703
        %v705 = vand.u32 %v704, 4294901760
        %706 = vmatmul.f32.gmra.mxu0 %v705
        %v707 = vpop.f32.mrf.mxu0
        %v708 = vadd.f32 %v609, %v707
        %709 = vdwg.mxu0
        %710 = vmatpush.msra.mxu0 0.0
        %711 = vmatpush.msra.mxu0 0.0
        %712 = vmatpush.msra.mxu0 0.0
        %713 = vmatpush.msra.mxu0 0.0
        %714 = vmatpush.msra.mxu0 0.0
        %715 = vmatpush.msra.mxu0 0.0
        %716 = vmatpush.msra.mxu0 0.0
        %717 = vmatpush.msra.mxu0 0.0
        %718 = vmatpush.msra.mxu0 0.0
        %719 = vmatpush.msra.mxu0 0.0
        %720 = vmatpush.msra.mxu0 0.0
        %721 = vmatpush.msra.mxu0 0.0
        %v722 = vand.u32 %v262, 4294901760
        %v723 = vsub.f32 %v262, %v722
        %v724 = vand.u32 %v723, 4294901760
        %725 = vmatpush.msra.mxu0 %v724
        %v726 = vand.u32 %v261, 4294901760
        %v727 = vsub.f32 %v261, %v726
        %v728 = vand.u32 %v727, 4294901760
        %729 = vmatpush.msra.mxu0 %v728
        %v730 = vand.u32 %v260, 4294901760
        %v731 = vsub.f32 %v260, %v730
        %v732 = vand.u32 %v731, 4294901760
        %733 = vmatpush.msra.mxu0 %v732
        %v734 = vand.u32 %v259, 4294901760
        %v735 = vsub.f32 %v259, %v734
        %v736 = vand.u32 %v735, 4294901760
        %737 = vmatpush.msra.mxu0 %v736
        %v738 = vand.u32 %v269, 4294901760
        %739 = vmatmul.f32.gmra.mxu0 %v738
        %v740 = vpop.f32.mrf.mxu0
        %v741 = vadd.f32 %v636, %v740
        %v742 = vand.u32 %v272, 4294901760
        %743 = vmatmul.f32.gmra.mxu0 %v742
        %v744 = vpop.f32.mrf.mxu0
        %v745 = vadd.f32 %v642, %v744
        %v746 = vand.u32 %v275, 4294901760
        %747 = vmatmul.f32.gmra.mxu0 %v746
        %v748 = vpop.f32.mrf.mxu0
        %v749 = vadd.f32 %v648, %v748
        %v750 = vand.u32 %v278, 4294901760
        %751 = vmatmul.f32.gmra.mxu0 %v750
        %v752 = vpop.f32.mrf.mxu0
        %v753 = vadd.f32 %v654, %v752
        %v754 = vand.u32 %v281, 4294901760
        %755 = vmatmul.f32.gmra.mxu0 %v754
        %v756 = vpop.f32.mrf.mxu0
        %v757 = vadd.f32 %v660, %v756
        %v758 = vand.u32 %v284, 4294901760
        %759 = vmatmul.f32.gmra.mxu0 %v758
        %v760 = vpop.f32.mrf.mxu0
        %v761 = vadd.f32 %v666, %v760
        %v762 = vand.u32 %v287, 4294901760
        %763 = vmatmul.f32.gmra.mxu0 %v762
        %v764 = vpop.f32.mrf.mxu0
        %v765 = vadd.f32 %v672, %v764
        %v766 = vand.u32 %v290, 4294901760
        %767 = vmatmul.f32.gmra.mxu0 %v766
        %v768 = vpop.f32.mrf.mxu0
        %v769 = vadd.f32 %v678, %v768
        %v770 = vand.u32 %v293, 4294901760
        %771 = vmatmul.f32.gmra.mxu0 %v770
        %v772 = vpop.f32.mrf.mxu0
        %v773 = vadd.f32 %v684, %v772
        %v774 = vand.u32 %v296, 4294901760
        %775 = vmatmul.f32.gmra.mxu0 %v774
        %v776 = vpop.f32.mrf.mxu0
        %v777 = vadd.f32 %v690, %v776
        %v778 = vand.u32 %v299, 4294901760
        %779 = vmatmul.f32.gmra.mxu0 %v778
        %v780 = vpop.f32.mrf.mxu0
        %v781 = vadd.f32 %v696, %v780
        %v782 = vand.u32 %v302, 4294901760
        %783 = vmatmul.f32.gmra.mxu0 %v782
        %v784 = vpop.f32.mrf.mxu0
        %v785 = vadd.f32 %v702, %v784
        %v786 = vand.u32 %v305, 4294901760
        %787 = vmatmul.f32.gmra.mxu0 %v786
        %v788 = vpop.f32.mrf.mxu0
        %v789 = vadd.f32 %v708, %v788
        %790 = vdwg.mxu0
        %791 = vmatpush.msra.mxu0 0.0
        %792 = vmatpush.msra.mxu0 0.0
        %793 = vmatpush.msra.mxu0 0.0
        %794 = vmatpush.msra.mxu0 0.0
        %795 = vmatpush.msra.mxu0 0.0
        %796 = vmatpush.msra.mxu0 0.0
        %797 = vmatpush.msra.mxu0 0.0
        %798 = vmatpush.msra.mxu0 0.0
        %799 = vmatpush.msra.mxu0 0.0
        %800 = vmatpush.msra.mxu0 0.0
        %801 = vmatpush.msra.mxu0 0.0
        %802 = vmatpush.msra.mxu0 0.0
        %v803 = vand.u32 %v262, 4294901760
        %804 = vmatpush.msra.mxu0 %v803
        %v805 = vand.u32 %v261, 4294901760
        %806 = vmatpush.msra.mxu0 %v805
        %v807 = vand.u32 %v260, 4294901760
        %808 = vmatpush.msra.mxu0 %v807
        %v809 = vand.u32 %v259, 4294901760
        %810 = vmatpush.msra.mxu0 %v809
        %v811 = vand.u32 %v269, 4294901760
        %812 = vmatmul.f32.gmra.mxu0 %v811
        %v813 = vpop.f32.mrf.mxu0
        %v814 = vadd.f32 %v741, %v813
        %v815 = vand.u32 %v272, 4294901760
        %816 = vmatmul.f32.gmra.mxu0 %v815
        %v817 = vpop.f32.mrf.mxu0
        %v818 = vadd.f32 %v745, %v817
        %v819 = vand.u32 %v275, 4294901760
        %820 = vmatmul.f32.gmra.mxu0 %v819
        %v821 = vpop.f32.mrf.mxu0
        %v822 = vadd.f32 %v749, %v821
        %v823 = vand.u32 %v278, 4294901760
        %824 = vmatmul.f32.gmra.mxu0 %v823
        %v825 = vpop.f32.mrf.mxu0
        %v826 = vadd.f32 %v753, %v825
        %v827 = vand.u32 %v281, 4294901760
        %828 = vmatmul.f32.gmra.mxu0 %v827
        %v829 = vpop.f32.mrf.mxu0
        %v830 = vadd.f32 %v757, %v829
        %v831 = vand.u32 %v284, 4294901760
        %832 = vmatmul.f32.gmra.mxu0 %v831
        %v833 = vpop.f32.mrf.mxu0
        %v834 = vadd.f32 %v761, %v833
        %v835 = vand.u32 %v287, 4294901760
        %836 = vmatmul.f32.gmra.mxu0 %v835
        %v837 = vpop.f32.mrf.mxu0
        %v838 = vadd.f32 %v765, %v837
        %v839 = vand.u32 %v290, 4294901760
        %840 = vmatmul.f32.gmra.mxu0 %v839
        %v841 = vpop.f32.mrf.mxu0
        %v842 = vadd.f32 %v769, %v841
        %v843 = vand.u32 %v293, 4294901760
        %844 = vmatmul.f32.gmra.mxu0 %v843
        %v845 = vpop.f32.mrf.mxu0
        %v846 = vadd.f32 %v773, %v845
        %v847 = vand.u32 %v296, 4294901760
        %848 = vmatmul.f32.gmra.mxu0 %v847
        %v849 = vpop.f32.mrf.mxu0
        %v850 = vadd.f32 %v777, %v849
        %v851 = vand.u32 %v299, 4294901760
        %852 = vmatmul.f32.gmra.mxu0 %v851
        %v853 = vpop.f32.mrf.mxu0
        %v854 = vadd.f32 %v781, %v853
        %v855 = vand.u32 %v302, 4294901760
        %856 = vmatmul.f32.gmra.mxu0 %v855
        %v857 = vpop.f32.mrf.mxu0
        %v858 = vadd.f32 %v785, %v857
        %v859 = vand.u32 %v305, 4294901760
        %860 = vmatmul.f32.gmra.mxu0 %v859
        %v861 = vpop.f32.mrf.mxu0
        %v862 = vadd.f32 %v789, %v861
        %863 = vdwg.mxu0
        %v864 = vmax.f32 %v814, 0.0
        %v865 = vmax.f32 %v818, 0.0
        %v866 = vmax.f32 %v822, 0.0
        %v867 = vmax.f32 %v826, 0.0
        %v868 = vmax.f32 %v830, 0.0
        %v869 = vmax.f32 %v834, 0.0
        %v870 = vmax.f32 %v838, 0.0
        %v871 = vmax.f32 %v842, 0.0
        %v872 = vmax.f32 %v846, 0.0
        %v873 = vmax.f32 %v850, 0.0
        %v874 = vmax.f32 %v854, 0.0
        %v875 = vmax.f32 %v858, 0.0
        %v876 = vmax.f32 %v862, 0.0
        %v877 = vld [vmem:[%s3] sm:$0xff]
        %v878 = vld [vmem:[%s3 + $0x8] sm:$0xff]
        %v879 = vld [vmem:[%s3 + $0x10] sm:$0xff]
        %v880 = vld [vmem:[%s3 + $0x18] sm:$0xff]
        %v881 = vld [vmem:[%s3 + $0x20] sm:$0xff]
        %v882 = vld [vmem:[%s3 + $0x28] sm:$0xff]
        %v883 = vld [vmem:[%s3 + $0x30] sm:$0xff]
        %v884 = vld [vmem:[%s3 + $0x38] sm:$0xff]
        %v885 = vld [vmem:[%s4] sm:$0x1]
        %v887 = vperm.slane %v885, 0
        %vm889 = vcmask 523264
        %v891 = vsel %vm889, %v864, 0
        %v894 = vsel %vm889, %v865, 0
        %v897 = vsel %vm889, %v866, 0
        %v900 = vsel %vm889, %v867, 0
        %v903 = vsel %vm889, %v868, 0
        %v906 = vsel %vm889, %v869, 0
        %v909 = vsel %vm889, %v870, 0
        %v912 = vsel %vm889, %v871, 0
        %v915 = vsel %vm889, %v872, 0
        %v918 = vsel %vm889, %v873, 0
        %v921 = vsel %vm889, %v874, 0
        %v924 = vsel %vm889, %v875, 0
        %v927 = vsel %vm889, %v876, 0
        %929 = vmatpush.msra.mxu0 0.0
        %930 = vmatpush.msra.mxu0 0.0
        %931 = vmatpush.msra.mxu0 0.0
        %932 = vmatpush.msra.mxu0 0.0
        %933 = vmatpush.msra.mxu0 0.0
        %934 = vmatpush.msra.mxu0 0.0
        %935 = vmatpush.msra.mxu0 0.0
        %936 = vmatpush.msra.mxu0 0.0
        %v937 = vand.u32 %v884, 4294901760
        %938 = vmatpush.msra.mxu0 %v937
        %v939 = vand.u32 %v883, 4294901760
        %940 = vmatpush.msra.mxu0 %v939
        %v941 = vand.u32 %v882, 4294901760
        %942 = vmatpush.msra.mxu0 %v941
        %v943 = vand.u32 %v881, 4294901760
        %944 = vmatpush.msra.mxu0 %v943
        %v945 = vand.u32 %v880, 4294901760
        %946 = vmatpush.msra.mxu0 %v945
        %v947 = vand.u32 %v879, 4294901760
        %948 = vmatpush.msra.mxu0 %v947
        %v949 = vand.u32 %v878, 4294901760
        %950 = vmatpush.msra.mxu0 %v949
        %v951 = vand.u32 %v877, 4294901760
        %952 = vmatpush.msra.mxu0 %v951
        %v953 = vand.u32 %v891, 4294901760
        %v954 = vsub.f32 %v891, %v953
        %v955 = vand.u32 %v954, 4294901760
        %v956 = vsub.f32 %v954, %v955
        %v957 = vand.u32 %v956, 4294901760
        %958 = vmatmul.f32.gmra.mxu0 %v957
        %v959 = vpop.f32.mrf.mxu0
        %v960 = vadd.f32 %v887, %v959
        %v961 = vand.u32 %v894, 4294901760
        %v962 = vsub.f32 %v894, %v961
        %v963 = vand.u32 %v962, 4294901760
        %v964 = vsub.f32 %v962, %v963
        %v965 = vand.u32 %v964, 4294901760
        %966 = vmatmul.f32.gmra.mxu0 %v965
        %v967 = vpop.f32.mrf.mxu0
        %v968 = vadd.f32 %v887, %v967
        %v969 = vand.u32 %v897, 4294901760
        %v970 = vsub.f32 %v897, %v969
        %v971 = vand.u32 %v970, 4294901760
        %v972 = vsub.f32 %v970, %v971
        %v973 = vand.u32 %v972, 4294901760
        %974 = vmatmul.f32.gmra.mxu0 %v973
        %v975 = vpop.f32.mrf.mxu0
        %v976 = vadd.f32 %v887, %v975
        %v977 = vand.u32 %v900, 4294901760
        %v978 = vsub.f32 %v900, %v977
        %v979 = vand.u32 %v978, 4294901760
        %v980 = vsub.f32 %v978, %v979
        %v981 = vand.u32 %v980, 4294901760
        %982 = vmatmul.f32.gmra.mxu0 %v981
        %v983 = vpop.f32.mrf.mxu0
        %v984 = vadd.f32 %v887, %v983
        %v985 = vand.u32 %v903, 4294901760
        %v986 = vsub.f32 %v903, %v985
        %v987 = vand.u32 %v986, 4294901760
        %v988 = vsub.f32 %v986, %v987
        %v989 = vand.u32 %v988, 4294901760
        %990 = vmatmul.f32.gmra.mxu0 %v989
        %v991 = vpop.f32.mrf.mxu0
        %v992 = vadd.f32 %v887, %v991
        %v993 = vand.u32 %v906, 4294901760
        %v994 = vsub.f32 %v906, %v993
        %v995 = vand.u32 %v994, 4294901760
        %v996 = vsub.f32 %v994, %v995
        %v997 = vand.u32 %v996, 4294901760
        %998 = vmatmul.f32.gmra.mxu0 %v997
        %v999 = vpop.f32.mrf.mxu0
        %v1000 = vadd.f32 %v887, %v999
        %v1001 = vand.u32 %v909, 4294901760
        %v1002 = vsub.f32 %v909, %v1001
        %v1003 = vand.u32 %v1002, 4294901760
        %v1004 = vsub.f32 %v1002, %v1003
        %v1005 = vand.u32 %v1004, 4294901760
        %1006 = vmatmul.f32.gmra.mxu0 %v1005
        %v1007 = vpop.f32.mrf.mxu0
        %v1008 = vadd.f32 %v887, %v1007
        %v1009 = vand.u32 %v912, 4294901760
        %v1010 = vsub.f32 %v912, %v1009
        %v1011 = vand.u32 %v1010, 4294901760
        %v1012 = vsub.f32 %v1010, %v1011
        %v1013 = vand.u32 %v1012, 4294901760
        %1014 = vmatmul.f32.gmra.mxu0 %v1013
        %v1015 = vpop.f32.mrf.mxu0
        %v1016 = vadd.f32 %v887, %v1015
        %v1017 = vand.u32 %v915, 4294901760
        %v1018 = vsub.f32 %v915, %v1017
        %v1019 = vand.u32 %v1018, 4294901760
        %v1020 = vsub.f32 %v1018, %v1019
        %v1021 = vand.u32 %v1020, 4294901760
        %1022 = vmatmul.f32.gmra.mxu0 %v1021
        %v1023 = vpop.f32.mrf.mxu0
        %v1024 = vadd.f32 %v887, %v1023
        %v1025 = vand.u32 %v918, 4294901760
        %v1026 = vsub.f32 %v918, %v1025
        %v1027 = vand.u32 %v1026, 4294901760
        %v1028 = vsub.f32 %v1026, %v1027
        %v1029 = vand.u32 %v1028, 4294901760
        %1030 = vmatmul.f32.gmra.mxu0 %v1029
        %v1031 = vpop.f32.mrf.mxu0
        %v1032 = vadd.f32 %v887, %v1031
        %v1033 = vand.u32 %v921, 4294901760
        %v1034 = vsub.f32 %v921, %v1033
        %v1035 = vand.u32 %v1034, 4294901760
        %v1036 = vsub.f32 %v1034, %v1035
        %v1037 = vand.u32 %v1036, 4294901760
        %1038 = vmatmul.f32.gmra.mxu0 %v1037
        %v1039 = vpop.f32.mrf.mxu0
        %v1040 = vadd.f32 %v887, %v1039
        %v1041 = vand.u32 %v924, 4294901760
        %v1042 = vsub.f32 %v924, %v1041
        %v1043 = vand.u32 %v1042, 4294901760
        %v1044 = vsub.f32 %v1042, %v1043
        %v1045 = vand.u32 %v1044, 4294901760
        %1046 = vmatmul.f32.gmra.mxu0 %v1045
        %v1047 = vpop.f32.mrf.mxu0
        %v1048 = vadd.f32 %v887, %v1047
        %v1049 = vand.u32 %v927, 4294901760
        %v1050 = vsub.f32 %v927, %v1049
        %v1051 = vand.u32 %v1050, 4294901760
        %v1052 = vsub.f32 %v1050, %v1051
        %v1053 = vand.u32 %v1052, 4294901760
        %1054 = vmatmul.f32.gmra.mxu0 %v1053
        %v1055 = vpop.f32.mrf.mxu0
        %v1056 = vadd.f32 %v887, %v1055
        %1057 = vdwg.mxu0
        %1058 = vmatpush.msra.mxu0 0.0
        %1059 = vmatpush.msra.mxu0 0.0
        %1060 = vmatpush.msra.mxu0 0.0
        %1061 = vmatpush.msra.mxu0 0.0
        %1062 = vmatpush.msra.mxu0 0.0
        %1063 = vmatpush.msra.mxu0 0.0
        %1064 = vmatpush.msra.mxu0 0.0
        %1065 = vmatpush.msra.mxu0 0.0
        %v1066 = vand.u32 %v884, 4294901760
        %v1067 = vsub.f32 %v884, %v1066
        %v1068 = vand.u32 %v1067, 4294901760
        %v1069 = vsub.f32 %v1067, %v1068
        %v1070 = vand.u32 %v1069, 4294901760
        %1071 = vmatpush.msra.mxu0 %v1070
        %v1072 = vand.u32 %v883, 4294901760
        %v1073 = vsub.f32 %v883, %v1072
        %v1074 = vand.u32 %v1073, 4294901760
        %v1075 = vsub.f32 %v1073, %v1074
        %v1076 = vand.u32 %v1075, 4294901760
        %1077 = vmatpush.msra.mxu0 %v1076
        %v1078 = vand.u32 %v882, 4294901760
        %v1079 = vsub.f32 %v882, %v1078
        %v1080 = vand.u32 %v1079, 4294901760
        %v1081 = vsub.f32 %v1079, %v1080
        %v1082 = vand.u32 %v1081, 4294901760
        %1083 = vmatpush.msra.mxu0 %v1082
        %v1084 = vand.u32 %v881, 4294901760
        %v1085 = vsub.f32 %v881, %v1084
        %v1086 = vand.u32 %v1085, 4294901760
        %v1087 = vsub.f32 %v1085, %v1086
        %v1088 = vand.u32 %v1087, 4294901760
        %1089 = vmatpush.msra.mxu0 %v1088
        %v1090 = vand.u32 %v880, 4294901760
        %v1091 = vsub.f32 %v880, %v1090
        %v1092 = vand.u32 %v1091, 4294901760
        %v1093 = vsub.f32 %v1091, %v1092
        %v1094 = vand.u32 %v1093, 4294901760
        %1095 = vmatpush.msra.mxu0 %v1094
        %v1096 = vand.u32 %v879, 4294901760
        %v1097 = vsub.f32 %v879, %v1096
        %v1098 = vand.u32 %v1097, 4294901760
        %v1099 = vsub.f32 %v1097, %v1098
        %v1100 = vand.u32 %v1099, 4294901760
        %1101 = vmatpush.msra.mxu0 %v1100
        %v1102 = vand.u32 %v878, 4294901760
        %v1103 = vsub.f32 %v878, %v1102
        %v1104 = vand.u32 %v1103, 4294901760
        %v1105 = vsub.f32 %v1103, %v1104
        %v1106 = vand.u32 %v1105, 4294901760
        %1107 = vmatpush.msra.mxu0 %v1106
        %v1108 = vand.u32 %v877, 4294901760
        %v1109 = vsub.f32 %v877, %v1108
        %v1110 = vand.u32 %v1109, 4294901760
        %v1111 = vsub.f32 %v1109, %v1110
        %v1112 = vand.u32 %v1111, 4294901760
        %1113 = vmatpush.msra.mxu0 %v1112
        %v1114 = vand.u32 %v891, 4294901760
        %1115 = vmatmul.f32.gmra.mxu0 %v1114
        %v1116 = vpop.f32.mrf.mxu0
        %v1117 = vadd.f32 %v960, %v1116
        %v1118 = vand.u32 %v894, 4294901760
        %1119 = vmatmul.f32.gmra.mxu0 %v1118
        %v1120 = vpop.f32.mrf.mxu0
        %v1121 = vadd.f32 %v968, %v1120
        %v1122 = vand.u32 %v897, 4294901760
        %1123 = vmatmul.f32.gmra.mxu0 %v1122
        %v1124 = vpop.f32.mrf.mxu0
        %v1125 = vadd.f32 %v976, %v1124
        %v1126 = vand.u32 %v900, 4294901760
        %1127 = vmatmul.f32.gmra.mxu0 %v1126
        %v1128 = vpop.f32.mrf.mxu0
        %v1129 = vadd.f32 %v984, %v1128
        %v1130 = vand.u32 %v903, 4294901760
        %1131 = vmatmul.f32.gmra.mxu0 %v1130
        %v1132 = vpop.f32.mrf.mxu0
        %v1133 = vadd.f32 %v992, %v1132
        %v1134 = vand.u32 %v906, 4294901760
        %1135 = vmatmul.f32.gmra.mxu0 %v1134
        %v1136 = vpop.f32.mrf.mxu0
        %v1137 = vadd.f32 %v1000, %v1136
        %v1138 = vand.u32 %v909, 4294901760
        %1139 = vmatmul.f32.gmra.mxu0 %v1138
        %v1140 = vpop.f32.mrf.mxu0
        %v1141 = vadd.f32 %v1008, %v1140
        %v1142 = vand.u32 %v912, 4294901760
        %1143 = vmatmul.f32.gmra.mxu0 %v1142
        %v1144 = vpop.f32.mrf.mxu0
        %v1145 = vadd.f32 %v1016, %v1144
        %v1146 = vand.u32 %v915, 4294901760
        %1147 = vmatmul.f32.gmra.mxu0 %v1146
        %v1148 = vpop.f32.mrf.mxu0
        %v1149 = vadd.f32 %v1024, %v1148
        %v1150 = vand.u32 %v918, 4294901760
        %1151 = vmatmul.f32.gmra.mxu0 %v1150
        %v1152 = vpop.f32.mrf.mxu0
        %v1153 = vadd.f32 %v1032, %v1152
        %v1154 = vand.u32 %v921, 4294901760
        %1155 = vmatmul.f32.gmra.mxu0 %v1154
        %v1156 = vpop.f32.mrf.mxu0
        %v1157 = vadd.f32 %v1040, %v1156
        %v1158 = vand.u32 %v924, 4294901760
        %1159 = vmatmul.f32.gmra.mxu0 %v1158
        %v1160 = vpop.f32.mrf.mxu0
        %v1161 = vadd.f32 %v1048, %v1160
        %v1162 = vand.u32 %v927, 4294901760
        %1163 = vmatmul.f32.gmra.mxu0 %v1162
        %v1164 = vpop.f32.mrf.mxu0
        %v1165 = vadd.f32 %v1056, %v1164
        %1166 = vdwg.mxu0
        %1167 = vmatpush.msra.mxu0 0.0
        %1168 = vmatpush.msra.mxu0 0.0
        %1169 = vmatpush.msra.mxu0 0.0
        %1170 = vmatpush.msra.mxu0 0.0
        %1171 = vmatpush.msra.mxu0 0.0
        %1172 = vmatpush.msra.mxu0 0.0
        %1173 = vmatpush.msra.mxu0 0.0
        %1174 = vmatpush.msra.mxu0 0.0
        %v1175 = vand.u32 %v884, 4294901760
        %v1176 = vsub.f32 %v884, %v1175
        %1177 = vmatpush.msra.mxu0 %v1176
        %v1178 = vand.u32 %v883, 4294901760
        %v1179 = vsub.f32 %v883, %v1178
        %1180 = vmatpush.msra.mxu0 %v1179
        %v1181 = vand.u32 %v882, 4294901760
        %v1182 = vsub.f32 %v882, %v1181
        %1183 = vmatpush.msra.mxu0 %v1182
        %v1184 = vand.u32 %v881, 4294901760
        %v1185 = vsub.f32 %v881, %v1184
        %1186 = vmatpush.msra.mxu0 %v1185
        %v1187 = vand.u32 %v880, 4294901760
        %v1188 = vsub.f32 %v880, %v1187
        %1189 = vmatpush.msra.mxu0 %v1188
        %v1190 = vand.u32 %v879, 4294901760
        %v1191 = vsub.f32 %v879, %v1190
        %1192 = vmatpush.msra.mxu0 %v1191
        %v1193 = vand.u32 %v878, 4294901760
        %v1194 = vsub.f32 %v878, %v1193
        %1195 = vmatpush.msra.mxu0 %v1194
        %v1196 = vand.u32 %v877, 4294901760
        %v1197 = vsub.f32 %v877, %v1196
        %1198 = vmatpush.msra.mxu0 %v1197
        %v1199 = vand.u32 %v891, 4294901760
        %v1200 = vsub.f32 %v891, %v1199
        %1201 = vmatmul.f32.gmra.mxu0 %v1200
        %v1202 = vpop.f32.mrf.mxu0
        %v1203 = vadd.f32 %v1117, %v1202
        %v1204 = vand.u32 %v894, 4294901760
        %v1205 = vsub.f32 %v894, %v1204
        %1206 = vmatmul.f32.gmra.mxu0 %v1205
        %v1207 = vpop.f32.mrf.mxu0
        %v1208 = vadd.f32 %v1121, %v1207
        %v1209 = vand.u32 %v897, 4294901760
        %v1210 = vsub.f32 %v897, %v1209
        %1211 = vmatmul.f32.gmra.mxu0 %v1210
        %v1212 = vpop.f32.mrf.mxu0
        %v1213 = vadd.f32 %v1125, %v1212
        %v1214 = vand.u32 %v900, 4294901760
        %v1215 = vsub.f32 %v900, %v1214
        %1216 = vmatmul.f32.gmra.mxu0 %v1215
        %v1217 = vpop.f32.mrf.mxu0
        %v1218 = vadd.f32 %v1129, %v1217
        %v1219 = vand.u32 %v903, 4294901760
        %v1220 = vsub.f32 %v903, %v1219
        %1221 = vmatmul.f32.gmra.mxu0 %v1220
        %v1222 = vpop.f32.mrf.mxu0
        %v1223 = vadd.f32 %v1133, %v1222
        %v1224 = vand.u32 %v906, 4294901760
        %v1225 = vsub.f32 %v906, %v1224
        %1226 = vmatmul.f32.gmra.mxu0 %v1225
        %v1227 = vpop.f32.mrf.mxu0
        %v1228 = vadd.f32 %v1137, %v1227
        %v1229 = vand.u32 %v909, 4294901760
        %v1230 = vsub.f32 %v909, %v1229
        %1231 = vmatmul.f32.gmra.mxu0 %v1230
        %v1232 = vpop.f32.mrf.mxu0
        %v1233 = vadd.f32 %v1141, %v1232
        %v1234 = vand.u32 %v912, 4294901760
        %v1235 = vsub.f32 %v912, %v1234
        %1236 = vmatmul.f32.gmra.mxu0 %v1235
        %v1237 = vpop.f32.mrf.mxu0
        %v1238 = vadd.f32 %v1145, %v1237
        %v1239 = vand.u32 %v915, 4294901760
        %v1240 = vsub.f32 %v915, %v1239
        %1241 = vmatmul.f32.gmra.mxu0 %v1240
        %v1242 = vpop.f32.mrf.mxu0
        %v1243 = vadd.f32 %v1149, %v1242
        %v1244 = vand.u32 %v918, 4294901760
        %v1245 = vsub.f32 %v918, %v1244
        %1246 = vmatmul.f32.gmra.mxu0 %v1245
        %v1247 = vpop.f32.mrf.mxu0
        %v1248 = vadd.f32 %v1153, %v1247
        %v1249 = vand.u32 %v921, 4294901760
        %v1250 = vsub.f32 %v921, %v1249
        %1251 = vmatmul.f32.gmra.mxu0 %v1250
        %v1252 = vpop.f32.mrf.mxu0
        %v1253 = vadd.f32 %v1157, %v1252
        %v1254 = vand.u32 %v924, 4294901760
        %v1255 = vsub.f32 %v924, %v1254
        %1256 = vmatmul.f32.gmra.mxu0 %v1255
        %v1257 = vpop.f32.mrf.mxu0
        %v1258 = vadd.f32 %v1161, %v1257
        %v1259 = vand.u32 %v927, 4294901760
        %v1260 = vsub.f32 %v927, %v1259
        %1261 = vmatmul.f32.gmra.mxu0 %v1260
        %v1262 = vpop.f32.mrf.mxu0
        %v1263 = vadd.f32 %v1165, %v1262
        %1264 = vdwg.mxu0
        %1265 = vmatpush.msra.mxu0 0.0
        %1266 = vmatpush.msra.mxu0 0.0
        %1267 = vmatpush.msra.mxu0 0.0
        %1268 = vmatpush.msra.mxu0 0.0
        %1269 = vmatpush.msra.mxu0 0.0
        %1270 = vmatpush.msra.mxu0 0.0
        %1271 = vmatpush.msra.mxu0 0.0
        %1272 = vmatpush.msra.mxu0 0.0
        %v1273 = vand.u32 %v884, 4294901760
        %1274 = vmatpush.msra.mxu0 %v1273
        %v1275 = vand.u32 %v883, 4294901760
        %1276 = vmatpush.msra.mxu0 %v1275
        %v1277 = vand.u32 %v882, 4294901760
        %1278 = vmatpush.msra.mxu0 %v1277
        %v1279 = vand.u32 %v881, 4294901760
        %1280 = vmatpush.msra.mxu0 %v1279
        %v1281 = vand.u32 %v880, 4294901760
        %1282 = vmatpush.msra.mxu0 %v1281
        %v1283 = vand.u32 %v879, 4294901760
        %1284 = vmatpush.msra.mxu0 %v1283
        %v1285 = vand.u32 %v878, 4294901760
        %1286 = vmatpush.msra.mxu0 %v1285
        %v1287 = vand.u32 %v877, 4294901760
        %1288 = vmatpush.msra.mxu0 %v1287
        %v1289 = vand.u32 %v891, 4294901760
        %v1290 = vsub.f32 %v891, %v1289
        %v1291 = vand.u32 %v1290, 4294901760
        %1292 = vmatmul.f32.gmra.mxu0 %v1291
        %v1293 = vpop.f32.mrf.mxu0
        %v1294 = vadd.f32 %v1203, %v1293
        %v1295 = vand.u32 %v894, 4294901760
        %v1296 = vsub.f32 %v894, %v1295
        %v1297 = vand.u32 %v1296, 4294901760
        %1298 = vmatmul.f32.gmra.mxu0 %v1297
        %v1299 = vpop.f32.mrf.mxu0
        %v1300 = vadd.f32 %v1208, %v1299
        %v1301 = vand.u32 %v897, 4294901760
        %v1302 = vsub.f32 %v897, %v1301
        %v1303 = vand.u32 %v1302, 4294901760
        %1304 = vmatmul.f32.gmra.mxu0 %v1303
        %v1305 = vpop.f32.mrf.mxu0
        %v1306 = vadd.f32 %v1213, %v1305
        %v1307 = vand.u32 %v900, 4294901760
        %v1308 = vsub.f32 %v900, %v1307
        %v1309 = vand.u32 %v1308, 4294901760
        %1310 = vmatmul.f32.gmra.mxu0 %v1309
        %v1311 = vpop.f32.mrf.mxu0
        %v1312 = vadd.f32 %v1218, %v1311
        %v1313 = vand.u32 %v903, 4294901760
        %v1314 = vsub.f32 %v903, %v1313
        %v1315 = vand.u32 %v1314, 4294901760
        %1316 = vmatmul.f32.gmra.mxu0 %v1315
        %v1317 = vpop.f32.mrf.mxu0
        %v1318 = vadd.f32 %v1223, %v1317
        %v1319 = vand.u32 %v906, 4294901760
        %v1320 = vsub.f32 %v906, %v1319
        %v1321 = vand.u32 %v1320, 4294901760
        %1322 = vmatmul.f32.gmra.mxu0 %v1321
        %v1323 = vpop.f32.mrf.mxu0
        %v1324 = vadd.f32 %v1228, %v1323
        %v1325 = vand.u32 %v909, 4294901760
        %v1326 = vsub.f32 %v909, %v1325
        %v1327 = vand.u32 %v1326, 4294901760
        %1328 = vmatmul.f32.gmra.mxu0 %v1327
        %v1329 = vpop.f32.mrf.mxu0
        %v1330 = vadd.f32 %v1233, %v1329
        %v1331 = vand.u32 %v912, 4294901760
        %v1332 = vsub.f32 %v912, %v1331
        %v1333 = vand.u32 %v1332, 4294901760
        %1334 = vmatmul.f32.gmra.mxu0 %v1333
        %v1335 = vpop.f32.mrf.mxu0
        %v1336 = vadd.f32 %v1238, %v1335
        %v1337 = vand.u32 %v915, 4294901760
        %v1338 = vsub.f32 %v915, %v1337
        %v1339 = vand.u32 %v1338, 4294901760
        %1340 = vmatmul.f32.gmra.mxu0 %v1339
        %v1341 = vpop.f32.mrf.mxu0
        %v1342 = vadd.f32 %v1243, %v1341
        %v1343 = vand.u32 %v918, 4294901760
        %v1344 = vsub.f32 %v918, %v1343
        %v1345 = vand.u32 %v1344, 4294901760
        %1346 = vmatmul.f32.gmra.mxu0 %v1345
        %v1347 = vpop.f32.mrf.mxu0
        %v1348 = vadd.f32 %v1248, %v1347
        %v1349 = vand.u32 %v921, 4294901760
        %v1350 = vsub.f32 %v921, %v1349
        %v1351 = vand.u32 %v1350, 4294901760
        %1352 = vmatmul.f32.gmra.mxu0 %v1351
        %v1353 = vpop.f32.mrf.mxu0
        %v1354 = vadd.f32 %v1253, %v1353
        %v1355 = vand.u32 %v924, 4294901760
        %v1356 = vsub.f32 %v924, %v1355
        %v1357 = vand.u32 %v1356, 4294901760
        %1358 = vmatmul.f32.gmra.mxu0 %v1357
        %v1359 = vpop.f32.mrf.mxu0
        %v1360 = vadd.f32 %v1258, %v1359
        %v1361 = vand.u32 %v927, 4294901760
        %v1362 = vsub.f32 %v927, %v1361
        %v1363 = vand.u32 %v1362, 4294901760
        %1364 = vmatmul.f32.gmra.mxu0 %v1363
        %v1365 = vpop.f32.mrf.mxu0
        %v1366 = vadd.f32 %v1263, %v1365
        %1367 = vdwg.mxu0
        %1368 = vmatpush.msra.mxu0 0.0
        %1369 = vmatpush.msra.mxu0 0.0
        %1370 = vmatpush.msra.mxu0 0.0
        %1371 = vmatpush.msra.mxu0 0.0
        %1372 = vmatpush.msra.mxu0 0.0
        %1373 = vmatpush.msra.mxu0 0.0
        %1374 = vmatpush.msra.mxu0 0.0
        %1375 = vmatpush.msra.mxu0 0.0
        %v1376 = vand.u32 %v884, 4294901760
        %v1377 = vsub.f32 %v884, %v1376
        %v1378 = vand.u32 %v1377, 4294901760
        %1379 = vmatpush.msra.mxu0 %v1378
        %v1380 = vand.u32 %v883, 4294901760
        %v1381 = vsub.f32 %v883, %v1380
        %v1382 = vand.u32 %v1381, 4294901760
        %1383 = vmatpush.msra.mxu0 %v1382
        %v1384 = vand.u32 %v882, 4294901760
        %v1385 = vsub.f32 %v882, %v1384
        %v1386 = vand.u32 %v1385, 4294901760
        %1387 = vmatpush.msra.mxu0 %v1386
        %v1388 = vand.u32 %v881, 4294901760
        %v1389 = vsub.f32 %v881, %v1388
        %v1390 = vand.u32 %v1389, 4294901760
        %1391 = vmatpush.msra.mxu0 %v1390
        %v1392 = vand.u32 %v880, 4294901760
        %v1393 = vsub.f32 %v880, %v1392
        %v1394 = vand.u32 %v1393, 4294901760
        %1395 = vmatpush.msra.mxu0 %v1394
        %v1396 = vand.u32 %v879, 4294901760
        %v1397 = vsub.f32 %v879, %v1396
        %v1398 = vand.u32 %v1397, 4294901760
        %1399 = vmatpush.msra.mxu0 %v1398
        %v1400 = vand.u32 %v878, 4294901760
        %v1401 = vsub.f32 %v878, %v1400
        %v1402 = vand.u32 %v1401, 4294901760
        %1403 = vmatpush.msra.mxu0 %v1402
        %v1404 = vand.u32 %v877, 4294901760
        %v1405 = vsub.f32 %v877, %v1404
        %v1406 = vand.u32 %v1405, 4294901760
        %1407 = vmatpush.msra.mxu0 %v1406
        %v1408 = vand.u32 %v891, 4294901760
        %1409 = vmatmul.f32.gmra.mxu0 %v1408
        %v1410 = vpop.f32.mrf.mxu0
        %v1411 = vadd.f32 %v1294, %v1410
        %v1412 = vand.u32 %v894, 4294901760
        %1413 = vmatmul.f32.gmra.mxu0 %v1412
        %v1414 = vpop.f32.mrf.mxu0
        %v1415 = vadd.f32 %v1300, %v1414
        %v1416 = vand.u32 %v897, 4294901760
        %1417 = vmatmul.f32.gmra.mxu0 %v1416
        %v1418 = vpop.f32.mrf.mxu0
        %v1419 = vadd.f32 %v1306, %v1418
        %v1420 = vand.u32 %v900, 4294901760
        %1421 = vmatmul.f32.gmra.mxu0 %v1420
        %v1422 = vpop.f32.mrf.mxu0
        %v1423 = vadd.f32 %v1312, %v1422
        %v1424 = vand.u32 %v903, 4294901760
        %1425 = vmatmul.f32.gmra.mxu0 %v1424
        %v1426 = vpop.f32.mrf.mxu0
        %v1427 = vadd.f32 %v1318, %v1426
        %v1428 = vand.u32 %v906, 4294901760
        %1429 = vmatmul.f32.gmra.mxu0 %v1428
        %v1430 = vpop.f32.mrf.mxu0
        %v1431 = vadd.f32 %v1324, %v1430
        %v1432 = vand.u32 %v909, 4294901760
        %1433 = vmatmul.f32.gmra.mxu0 %v1432
        %v1434 = vpop.f32.mrf.mxu0
        %v1435 = vadd.f32 %v1330, %v1434
        %v1436 = vand.u32 %v912, 4294901760
        %1437 = vmatmul.f32.gmra.mxu0 %v1436
        %v1438 = vpop.f32.mrf.mxu0
        %v1439 = vadd.f32 %v1336, %v1438
        %v1440 = vand.u32 %v915, 4294901760
        %1441 = vmatmul.f32.gmra.mxu0 %v1440
        %v1442 = vpop.f32.mrf.mxu0
        %v1443 = vadd.f32 %v1342, %v1442
        %v1444 = vand.u32 %v918, 4294901760
        %1445 = vmatmul.f32.gmra.mxu0 %v1444
        %v1446 = vpop.f32.mrf.mxu0
        %v1447 = vadd.f32 %v1348, %v1446
        %v1448 = vand.u32 %v921, 4294901760
        %1449 = vmatmul.f32.gmra.mxu0 %v1448
        %v1450 = vpop.f32.mrf.mxu0
        %v1451 = vadd.f32 %v1354, %v1450
        %v1452 = vand.u32 %v924, 4294901760
        %1453 = vmatmul.f32.gmra.mxu0 %v1452
        %v1454 = vpop.f32.mrf.mxu0
        %v1455 = vadd.f32 %v1360, %v1454
        %v1456 = vand.u32 %v927, 4294901760
        %1457 = vmatmul.f32.gmra.mxu0 %v1456
        %v1458 = vpop.f32.mrf.mxu0
        %v1459 = vadd.f32 %v1366, %v1458
        %1460 = vdwg.mxu0
        %1461 = vmatpush.msra.mxu0 0.0
        %1462 = vmatpush.msra.mxu0 0.0
        %1463 = vmatpush.msra.mxu0 0.0
        %1464 = vmatpush.msra.mxu0 0.0
        %1465 = vmatpush.msra.mxu0 0.0
        %1466 = vmatpush.msra.mxu0 0.0
        %1467 = vmatpush.msra.mxu0 0.0
        %1468 = vmatpush.msra.mxu0 0.0
        %v1469 = vand.u32 %v884, 4294901760
        %1470 = vmatpush.msra.mxu0 %v1469
        %v1471 = vand.u32 %v883, 4294901760
        %1472 = vmatpush.msra.mxu0 %v1471
        %v1473 = vand.u32 %v882, 4294901760
        %1474 = vmatpush.msra.mxu0 %v1473
        %v1475 = vand.u32 %v881, 4294901760
        %1476 = vmatpush.msra.mxu0 %v1475
        %v1477 = vand.u32 %v880, 4294901760
        %1478 = vmatpush.msra.mxu0 %v1477
        %v1479 = vand.u32 %v879, 4294901760
        %1480 = vmatpush.msra.mxu0 %v1479
        %v1481 = vand.u32 %v878, 4294901760
        %1482 = vmatpush.msra.mxu0 %v1481
        %v1483 = vand.u32 %v877, 4294901760
        %1484 = vmatpush.msra.mxu0 %v1483
        %v1485 = vand.u32 %v891, 4294901760
        %1486 = vmatmul.f32.gmra.mxu0 %v1485
        %v1487 = vpop.f32.mrf.mxu0
        %v1488 = vadd.f32 %v1411, %v1487
        %v1489 = vand.u32 %v894, 4294901760
        %1490 = vmatmul.f32.gmra.mxu0 %v1489
        %v1491 = vpop.f32.mrf.mxu0
        %v1492 = vadd.f32 %v1415, %v1491
        %v1493 = vand.u32 %v897, 4294901760
        %1494 = vmatmul.f32.gmra.mxu0 %v1493
        %v1495 = vpop.f32.mrf.mxu0
        %v1496 = vadd.f32 %v1419, %v1495
        %v1497 = vand.u32 %v900, 4294901760
        %1498 = vmatmul.f32.gmra.mxu0 %v1497
        %v1499 = vpop.f32.mrf.mxu0
        %v1500 = vadd.f32 %v1423, %v1499
        %v1501 = vand.u32 %v903, 4294901760
        %1502 = vmatmul.f32.gmra.mxu0 %v1501
        %v1503 = vpop.f32.mrf.mxu0
        %v1504 = vadd.f32 %v1427, %v1503
        %v1505 = vand.u32 %v906, 4294901760
        %1506 = vmatmul.f32.gmra.mxu0 %v1505
        %v1507 = vpop.f32.mrf.mxu0
        %v1508 = vadd.f32 %v1431, %v1507
        %v1509 = vand.u32 %v909, 4294901760
        %1510 = vmatmul.f32.gmra.mxu0 %v1509
        %v1511 = vpop.f32.mrf.mxu0
        %v1512 = vadd.f32 %v1435, %v1511
        %v1513 = vand.u32 %v912, 4294901760
        %1514 = vmatmul.f32.gmra.mxu0 %v1513
        %v1515 = vpop.f32.mrf.mxu0
        %v1516 = vadd.f32 %v1439, %v1515
        %v1517 = vand.u32 %v915, 4294901760
        %1518 = vmatmul.f32.gmra.mxu0 %v1517
        %v1519 = vpop.f32.mrf.mxu0
        %v1520 = vadd.f32 %v1443, %v1519
        %v1521 = vand.u32 %v918, 4294901760
        %1522 = vmatmul.f32.gmra.mxu0 %v1521
        %v1523 = vpop.f32.mrf.mxu0
        %v1524 = vadd.f32 %v1447, %v1523
        %v1525 = vand.u32 %v921, 4294901760
        %1526 = vmatmul.f32.gmra.mxu0 %v1525
        %v1527 = vpop.f32.mrf.mxu0
        %v1528 = vadd.f32 %v1451, %v1527
        %v1529 = vand.u32 %v924, 4294901760
        %1530 = vmatmul.f32.gmra.mxu0 %v1529
        %v1531 = vpop.f32.mrf.mxu0
        %v1532 = vadd.f32 %v1455, %v1531
        %v1533 = vand.u32 %v927, 4294901760
        %1534 = vmatmul.f32.gmra.mxu0 %v1533
        %v1535 = vpop.f32.mrf.mxu0
        %v1536 = vadd.f32 %v1459, %v1535
        %1537 = vdwg.mxu0
        %vm1538 = vcmask 64512
        %1539 = vst.msk [vmem:[%s226] sm:$0xff] %vm1538, %v1488
        %1540 = vst.msk [vmem:[%s226 + $0x8] sm:$0xff] %vm1538, %v1492
        %1541 = vst.msk [vmem:[%s226 + $0x10] sm:$0xff] %vm1538, %v1496
        %1542 = vst.msk [vmem:[%s226 + $0x18] sm:$0xff] %vm1538, %v1500
        %1543 = vst.msk [vmem:[%s226 + $0x20] sm:$0xff] %vm1538, %v1504
        %1544 = vst.msk [vmem:[%s226 + $0x28] sm:$0xff] %vm1538, %v1508
        %1545 = vst.msk [vmem:[%s226 + $0x30] sm:$0xff] %vm1538, %v1512
        %1546 = vst.msk [vmem:[%s226 + $0x38] sm:$0xff] %vm1538, %v1516
        %1547 = vst.msk [vmem:[%s226 + $0x40] sm:$0xff] %vm1538, %v1520
        %1548 = vst.msk [vmem:[%s226 + $0x48] sm:$0xff] %vm1538, %v1524
        %1549 = vst.msk [vmem:[%s226 + $0x50] sm:$0xff] %vm1538, %v1528
        %1550 = vst.msk [vmem:[%s226 + $0x58] sm:$0xff] %vm1538, %v1532
        %1551 = vst.msk [vmem:[%s226 + $0x60] sm:$0xff] %vm1538, %v1536
        %s1552 = sand.u32 %s134, 1
        %s1553 = sand.u32 %s134, 1
        %s1554 = smul.addr %s1553, 104
        %s1555 = scalar_lea.vmem [#allocation2], %s1554
        // Predicated region
        $region41: #{sac_dnn_value_forward.1} parent=39 // pred_check
          %p1556 = pneg %p144
        $region42: #{sac_dnn_value_forward.1} parent=39 // pred_check_branch
          %1558 = sbr.rel (%p1556) target = $region44
        $region43: #{sac_dnn_value_forward.1} parent=39 // pred_region
          %s1559 = smul.u32 13, %s16
          %s1560 = ssub.s32 25, %s1559
          %p1561 = scmp.lt.s32.totalorder %s1560, 13
          %s1562 = scalar_select %p1561, %s1560, 13
          %s1563 = smul.u32 8, %s1562
          %p1564 = scmp.ne.s32.totalorder 0, %s1563
          %s1565 = smul.addr %s1559, 8
          %s1566 = scalar_lea.vmem %s5, %s1565
          // Predicated region
          $region45: #{sac_dnn_value_forward.1} parent=43 // pred_check
            %p1567 = pneg %p1564
          $region46: #{sac_dnn_value_forward.1} parent=43 // pred_check_branch
            %1569 = sbr.rel (%p1567) target = $region48
          $region47: #{sac_dnn_value_forward.1} parent=43 // pred_region
            // Predicated region
            $region49: #{sac_dnn_value_forward.1} parent=47 // pred_check
              _
            $region50: #{sac_dnn_value_forward.1} parent=47 // pred_check_branch
              %1571 = sbr.rel (0) target = $region52
            $region51: #{sac_dnn_value_forward.1} parent=47 // pred_region
              // Predicated region
              $region71: #{sac_dnn_value_forward.1} parent=51 // pred_check
                _
              $region72: #{sac_dnn_value_forward.1} parent=51 // pred_check_branch
                %1646 = sbr.rel (0) target = $region74
              $region73: #{sac_dnn_value_forward.1} parent=51 // pred_region
                %s1647 = sdiv.u32.pop %s1562, 13
                %s1648 = srem.u32.pop %s1562, 13
                // While loop
                $region75: #{sac_dnn_value_forward.1} parent=73 // loop_pre_header
                  _
                $region76: #{sac_dnn_value_forward.1} parent=73 // loop_header
                  %s1650 = sphi 0, %s1652
                  %p1651 = scmp.ge.s32.totalorder %s1650, %s1647
                  %s1655 = sphi 0, %s1686
                  %s1656 = sphi %s1555, %s1689
                  %s1657 = sphi %s1566, %s1690
                $region77: #{sac_dnn_value_forward.1} parent=73 // loop_header_branch
                  %1654 = sbr.rel (%p1651) target = $region81
                $region78: #{sac_dnn_value_forward.1} parent=73 // loop_body
                  %v1658 = vld [vmem:[%s1656] sm:$0xff]
                  %1659 = vst [vmem:[%s1657] sm:$0xff] %v1658
                  %v1660 = vld [vmem:[%s1656 + $0x8] sm:$0xff]
                  %1661 = vst [vmem:[%s1657 + $0x8] sm:$0xff] %v1660
                  %v1662 = vld [vmem:[%s1656 + $0x10] sm:$0xff]
                  %1663 = vst [vmem:[%s1657 + $0x10] sm:$0xff] %v1662
                  %v1664 = vld [vmem:[%s1656 + $0x18] sm:$0xff]
                  %1665 = vst [vmem:[%s1657 + $0x18] sm:$0xff] %v1664
                  %v1666 = vld [vmem:[%s1656 + $0x20] sm:$0xff]
                  %1667 = vst [vmem:[%s1657 + $0x20] sm:$0xff] %v1666
                  %v1668 = vld [vmem:[%s1656 + $0x28] sm:$0xff]
                  %1669 = vst [vmem:[%s1657 + $0x28] sm:$0xff] %v1668
                  %v1670 = vld [vmem:[%s1656 + $0x30] sm:$0xff]
                  %1671 = vst [vmem:[%s1657 + $0x30] sm:$0xff] %v1670
                  %v1672 = vld [vmem:[%s1656 + $0x38] sm:$0xff]
                  %1673 = vst [vmem:[%s1657 + $0x38] sm:$0xff] %v1672
                  %v1674 = vld [vmem:[%s1656 + $0x40] sm:$0xff]
                  %1675 = vst [vmem:[%s1657 + $0x40] sm:$0xff] %v1674
                  %v1676 = vld [vmem:[%s1656 + $0x48] sm:$0xff]
                  %1677 = vst [vmem:[%s1657 + $0x48] sm:$0xff] %v1676
                  %v1678 = vld [vmem:[%s1656 + $0x50] sm:$0xff]
                  %1679 = vst [vmem:[%s1657 + $0x50] sm:$0xff] %v1678
                  %v1680 = vld [vmem:[%s1656 + $0x58] sm:$0xff]
                  %1681 = vst [vmem:[%s1657 + $0x58] sm:$0xff] %v1680
                  %v1682 = vld [vmem:[%s1656 + $0x60] sm:$0xff]
                  %1683 = vst [vmem:[%s1657 + $0x60] sm:$0xff] %v1682
                  %s1684 = sadd.s32 1, %s1655
                  %p1685 = scmp.ge.s32.totalorder %s1684, %s1647
                  %s1686 = scalar_select %p1685, 0, %s1684
                  %s1687 = smul.u32 %s1686, 104
                  %s1688 = smul.u32 %s1686, 104
                  %s1689 = scalar_lea.vmem %s1555, %s1687 [#allocation2]
                  %s1690 = scalar_lea.vmem %s1566, %s1688
                $region79: #{sac_dnn_value_forward.1} parent=73 // loop_footer
                  %s1652 = sadd.s32 %s1650, 1
                $region80: #{sac_dnn_value_forward.1} parent=73 // loop_footer_branch
                  %1649 = sbr.rel target = $region76
                $region81: #{sac_dnn_value_forward.1} parent=73 // loop_exit
                  _
                %s1691 = sdiv.u32.pop %s1562, 13
                %s1692 = srem.u32.pop %s1562, 13
                %s1693 = smul.u32 %s1691, 13
                %s1694 = smul.u32 8, %s1693
                %s1695 = scalar_lea.vmem %s1555, %s1694 [#allocation2]
                %s1696 = smul.u32 8, %s1693
                %s1697 = scalar_lea.vmem %s1566, %s1696
                // While loop
                $region82: #{sac_dnn_value_forward.1} parent=73 // loop_pre_header
                  _
                $region83: #{sac_dnn_value_forward.1} parent=73 // loop_header
                  %s1699 = sphi 0, %s1701
                  %p1700 = scmp.ge.s32.totalorder %s1699, %s1692
                  %s1704 = sphi 0, %s1711
                  %s1705 = sphi %s1695, %s1714
                  %s1706 = sphi %s1697, %s1715
                $region84: #{sac_dnn_value_forward.1} parent=73 // loop_header_branch
                  %1703 = sbr.rel (%p1700) target = $region88
                $region85: #{sac_dnn_value_forward.1} parent=73 // loop_body
                  %v1707 = vld [vmem:[%s1705] sm:$0xff]
                  %1708 = vst [vmem:[%s1706] sm:$0xff] %v1707
                  %s1709 = sadd.s32 1, %s1704
                  %p1710 = scmp.ge.s32.totalorder %s1709, %s1692
                  %s1711 = scalar_select %p1710, 0, %s1709
                  %s1712 = smul.u32 %s1711, 8
                  %s1713 = smul.u32 %s1711, 8
                  %s1714 = scalar_lea.vmem %s1695, %s1712 [#allocation2]
                  %s1715 = scalar_lea.vmem %s1697, %s1713
                $region86: #{sac_dnn_value_forward.1} parent=73 // loop_footer
                  %s1701 = sadd.s32 %s1699, 1
                $region87: #{sac_dnn_value_forward.1} parent=73 // loop_footer_branch
                  %1698 = sbr.rel target = $region83
                $region88: #{sac_dnn_value_forward.1} parent=73 // loop_exit
                  _
              $region74: #{sac_dnn_value_forward.1} parent=51 // pred_fallthru
                _
              // Predicated region
              $region89: #{sac_dnn_value_forward.1} parent=51 // pred_check
                _
              $region90: #{sac_dnn_value_forward.1} parent=51 // pred_check_branch
                %1717 = sbr.rel target = $region92
              $region91: #{sac_dnn_value_forward.1} parent=51 // pred_region
                _
              $region92: #{sac_dnn_value_forward.1} parent=51 // pred_fallthru
                _
            $region52: #{sac_dnn_value_forward.1} parent=47 // pred_fallthru
              _
            // Predicated region
            $region53: #{sac_dnn_value_forward.1} parent=47 // pred_check
              _
            $region54: #{sac_dnn_value_forward.1} parent=47 // pred_check_branch
              %1573 = sbr.rel target = $region56
            $region55: #{sac_dnn_value_forward.1} parent=47 // pred_region
              %s1575 = ssub.s32 256, 1
              %s1576 = sdiv.u32.pop %s1562, 13
              %s1577 = srem.u32.pop %s1562, 13
              // While loop
              $region57: #{sac_dnn_value_forward.1} parent=55 // loop_pre_header
                _
              $region58: #{sac_dnn_value_forward.1} parent=55 // loop_header
                %s1579 = sphi 0, %s1581
                %p1580 = scmp.ge.s32.totalorder %s1579, %s1576
                %s1584 = sphi 0, %s1615
                %s1585 = sphi %s1555, %s1618
                %s1586 = sphi %s1566, %s1619
              $region59: #{sac_dnn_value_forward.1} parent=55 // loop_header_branch
                %1583 = sbr.rel (%p1580) target = $region63
              $region60: #{sac_dnn_value_forward.1} parent=55 // loop_body
                %v1587 = vld [vmem:[%s1585] sm:%s1575]
                %1588 = vst [vmem:[%s1586] sm:%s1575] %v1587
                %v1589 = vld [vmem:[%s1585 + $0x8] sm:%s1575]
                %1590 = vst [vmem:[%s1586 + $0x8] sm:%s1575] %v1589
                %v1591 = vld [vmem:[%s1585 + $0x10] sm:%s1575]
                %1592 = vst [vmem:[%s1586 + $0x10] sm:%s1575] %v1591
                %v1593 = vld [vmem:[%s1585 + $0x18] sm:%s1575]
                %1594 = vst [vmem:[%s1586 + $0x18] sm:%s1575] %v1593
                %v1595 = vld [vmem:[%s1585 + $0x20] sm:%s1575]
                %1596 = vst [vmem:[%s1586 + $0x20] sm:%s1575] %v1595
                %v1597 = vld [vmem:[%s1585 + $0x28] sm:%s1575]
                %1598 = vst [vmem:[%s1586 + $0x28] sm:%s1575] %v1597
                %v1599 = vld [vmem:[%s1585 + $0x30] sm:%s1575]
                %1600 = vst [vmem:[%s1586 + $0x30] sm:%s1575] %v1599
                %v1601 = vld [vmem:[%s1585 + $0x38] sm:%s1575]
                %1602 = vst [vmem:[%s1586 + $0x38] sm:%s1575] %v1601
                %v1603 = vld [vmem:[%s1585 + $0x40] sm:%s1575]
                %1604 = vst [vmem:[%s1586 + $0x40] sm:%s1575] %v1603
                %v1605 = vld [vmem:[%s1585 + $0x48] sm:%s1575]
                %1606 = vst [vmem:[%s1586 + $0x48] sm:%s1575] %v1605
                %v1607 = vld [vmem:[%s1585 + $0x50] sm:%s1575]
                %1608 = vst [vmem:[%s1586 + $0x50] sm:%s1575] %v1607
                %v1609 = vld [vmem:[%s1585 + $0x58] sm:%s1575]
                %1610 = vst [vmem:[%s1586 + $0x58] sm:%s1575] %v1609
                %v1611 = vld [vmem:[%s1585 + $0x60] sm:%s1575]
                %1612 = vst [vmem:[%s1586 + $0x60] sm:%s1575] %v1611
                %s1613 = sadd.s32 1, %s1584
                %p1614 = scmp.ge.s32.totalorder %s1613, %s1576
                %s1615 = scalar_select %p1614, 0, %s1613
                %s1616 = smul.u32 %s1615, 104
                %s1617 = smul.u32 %s1615, 104
                %s1618 = scalar_lea.vmem %s1555, %s1616 [#allocation2]
                %s1619 = scalar_lea.vmem %s1566, %s1617
              $region61: #{sac_dnn_value_forward.1} parent=55 // loop_footer
                %s1581 = sadd.s32 %s1579, 1
              $region62: #{sac_dnn_value_forward.1} parent=55 // loop_footer_branch
                %1578 = sbr.rel target = $region58
              $region63: #{sac_dnn_value_forward.1} parent=55 // loop_exit
                _
              %s1620 = sdiv.u32.pop %s1562, 13
              %s1621 = srem.u32.pop %s1562, 13
              %s1622 = smul.u32 %s1620, 13
              %s1623 = smul.u32 8, %s1622
              %s1624 = scalar_lea.vmem %s1555, %s1623 [#allocation2]
              %s1625 = smul.u32 8, %s1622
              %s1626 = scalar_lea.vmem %s1566, %s1625
              // While loop
              $region64: #{sac_dnn_value_forward.1} parent=55 // loop_pre_header
                _
              $region65: #{sac_dnn_value_forward.1} parent=55 // loop_header
                %s1628 = sphi 0, %s1630
                %p1629 = scmp.ge.s32.totalorder %s1628, %s1621
                %s1633 = sphi 0, %s1640
                %s1634 = sphi %s1624, %s1643
                %s1635 = sphi %s1626, %s1644
              $region66: #{sac_dnn_value_forward.1} parent=55 // loop_header_branch
                %1632 = sbr.rel (%p1629) target = $region70
              $region67: #{sac_dnn_value_forward.1} parent=55 // loop_body
                %v1636 = vld [vmem:[%s1634] sm:%s1575]
                %1637 = vst [vmem:[%s1635] sm:%s1575] %v1636
                %s1638 = sadd.s32 1, %s1633
                %p1639 = scmp.ge.s32.totalorder %s1638, %s1621
                %s1640 = scalar_select %p1639, 0, %s1638
                %s1641 = smul.u32 %s1640, 8
                %s1642 = smul.u32 %s1640, 8
                %s1643 = scalar_lea.vmem %s1624, %s1641 [#allocation2]
                %s1644 = scalar_lea.vmem %s1626, %s1642
              $region68: #{sac_dnn_value_forward.1} parent=55 // loop_footer
                %s1630 = sadd.s32 %s1628, 1
              $region69: #{sac_dnn_value_forward.1} parent=55 // loop_footer_branch
                %1627 = sbr.rel target = $region65
              $region70: #{sac_dnn_value_forward.1} parent=55 // loop_exit
                _
            $region56: #{sac_dnn_value_forward.1} parent=47 // pred_fallthru
              _
          $region48: #{sac_dnn_value_forward.1} parent=43 // pred_fallthru
            _
          %1718 = vnop
        $region44: #{sac_dnn_value_forward.1} parent=39 // pred_fallthru
          _
      $region40: #{sac_dnn_value_forward.1} parent=5 // pred_fallthru
        _
      %p1719 = scmp.le.s32.totalorder 2, %s11
      // Predicated region
      $region93: #{sac_dnn_value_forward.1} parent=5 // pred_check
        %p1720 = pneg %p1719
      $region94: #{sac_dnn_value_forward.1} parent=5 // pred_check_branch
        %1722 = sbr.rel (%p1720) target = $region96
      $region95: #{sac_dnn_value_forward.1} parent=5 // pred_region
        %s1723 = ssub.s32 %s11, 2
        // Predicated region
        $region97: #{sac_dnn_value_forward.1} parent=95 // pred_check
          %p1724 = pneg %p150
        $region98: #{sac_dnn_value_forward.1} parent=95 // pred_check_branch
          %1726 = sbr.rel (%p1724) target = $region100
        $region99: #{sac_dnn_value_forward.1} parent=95 // pred_region
          %s1727 = sand.u32 %s135, 1
          %s1728 = sand.u32 %s135, 1
          %s1729 = smul.addr %s1728, 104
          %s1730 = scalar_lea.vmem [#allocation2], %s1729
        $region100: #{sac_dnn_value_forward.1} parent=95 // pred_fallthru
          _
      $region96: #{sac_dnn_value_forward.1} parent=5 // pred_fallthru
        _
    $region6: #{sac_dnn_value_forward.1} parent=1 // loop_footer
      %s15 = sadd.s32 1, %s11
    $region7: #{sac_dnn_value_forward.1} parent=1 // loop_footer_branch
      %10 = sbr.rel target = $region3
    $region8: #{sac_dnn_value_forward.1} parent=1 // loop_exit
      _

</llo_original>
